<compile_context>
chip_gen: v7x
topology: tpu7x:2x2x1
jax: 0.10.0
libtpu: 0.0.40
codegen_flags: <defaults>
</compile_context>

<pallas_src>
import jax
import jax.numpy as jnp
from jax.experimental import pallas as pl
from jax.experimental.pallas import tpu as pltpu


def transform_kernel(x_ref, w1_ref, b1_ref, w2_ref, b2_ref, o_ref):
    """Single-invocation kernel; everything resident in VMEM.

    x_ref : (N, M, fv)  float32   activations, M = B*C
    w1_ref: (N, fv, bv) bfloat16  per-view Linear-1 weight, stored (in, out)
    b1_ref: (N, bv)     float32
    w2_ref: (N, bv, bv) bfloat16  per-view Linear-2 weight, stored (in, out)
    b2_ref: (N, bv)     float32
    o_ref : (M, bv)     float32   sum over views (dense (8,128) slab at toy shapes)
    """
    N, M, _ = x_ref.shape
    bv = o_ref.shape[-1]

    acc = jnp.zeros((M, bv), jnp.float32)   # (8,128) f32 == exactly one vreg

    # N is small & static -> fully unrolled: back-to-back MXU matmuls, weights
    # for a view are read from VMEM once and reused across all M rows.
    for v in range(N):
        xv = x_ref[v].astype(jnp.bfloat16)            # (M, fv)  one cast per view
        w1v = w1_ref[v]                                # (fv, bv) bf16
        w2v = w2_ref[v]                                # (bv, bv) bf16
        b1v = b1_ref[v:v + 1, :]                       # (1, bv)  f32
        b2v = b2_ref[v:v + 1, :]                       # (1, bv)  f32

        h = jnp.dot(xv, w1v, preferred_element_type=jnp.float32)     # (M, bv) f32
        h = jnp.maximum(h + b1v, 0.0)
        y = jnp.dot(h.astype(jnp.bfloat16), w2v,                     # one h cast
                    preferred_element_type=jnp.float32)
        y = jnp.maximum(y + b2v, 0.0)
        acc = acc + y

    o_ref[...] = acc


def transform_module(x, w1, b1, w2, b2, bv_size):
    """x: (B, N, C, H, W) float32.
    w1: (N, fv, bv), b1: (N, bv), w2: (N, bv, bv), b2: (N, bv)   (Linear stored (in, out)).
    Returns (B, C, bv_h, bv_w) float32."""
    B, N, C, H, W = x.shape
    fv = H * W
    bv = bv_size[0] * bv_size[1]
    M = B * C

    # (B,N,C,H,W) -> (N, B*C, fv).  Tiny (KB-scale) transpose done once in XLA
    # so the kernel sees a dense M dimension and dense lane-major fv rows.
    xf = x.reshape(B, N, C, fv).transpose(1, 0, 2, 3).reshape(N, M, fv)

    w1b = w1.astype(jnp.bfloat16)                 # no-op if params already bf16
    w2b = w2.astype(jnp.bfloat16)
    b1f = b1.reshape(N, bv).astype(jnp.float32)   # flat (N, bv): one dense VMEM tile
    b2f = b2.reshape(N, bv).astype(jnp.float32)

    flops = 2 * N * M * (fv * bv + bv * bv) + 4 * N * M * bv
    bytes_accessed = (xf.size * 4 + w1b.size * 2 + w2b.size * 2
                      + b1f.size * 4 + b2f.size * 4 + M * bv * 4)

    vmem = pltpu.MemorySpace.VMEM
    out_flat = pl.pallas_call(
        transform_kernel,
        out_shape=jax.ShapeDtypeStruct((M, bv), jnp.float32),
        in_specs=[pl.BlockSpec(memory_space=vmem)] * 5,
        out_specs=pl.BlockSpec(memory_space=vmem),
        cost_estimate=pl.CostEstimate(flops=flops, transcendentals=0,
                                      bytes_accessed=bytes_accessed),
    )(xf, w1b, b1f, w2b, b2f)

    # Row m = b*C + c, so this contiguous reshape reproduces (B, C, bv_h, bv_w).
    return out_flat.reshape(B, C, bv_size[0], bv_size[1])


def reference(x, w1, b1, w2, b2, bv_size):
    """Pure-JAX reference with the same bf16-operand / f32-accumulate numerics."""
    B, N, C, H, W = x.shape
    fv = H * W
    xf = x.reshape(B, N, C, fv).astype(jnp.bfloat16)
    w1b = w1.astype(jnp.bfloat16)
    w2b = w2.astype(jnp.bfloat16)
    acc = None
    for v in range(N):
        h = jnp.einsum('bcf,fo->bco', xf[:, v], w1b[v],
                       preferred_element_type=jnp.float32)
        h = jnp.maximum(h + b1[v].astype(jnp.float32), 0.0)
        y = jnp.einsum('bco,op->bcp', h.astype(jnp.bfloat16), w2b[v],
                       preferred_element_type=jnp.float32)
        y = jnp.maximum(y + b2[v].astype(jnp.float32), 0.0)
        acc = y if acc is None else acc + y
    return acc.reshape(B, C, bv_size[0], bv_size[1])


if __name__ == "__main__":
    # Small shapes consistent with the module:
    #   fv_size = (8, 16) -> fv_dim = 128,  bv_size = (8, 16) -> bv_dim = 128
    #   B=2, n_view=6, C=4  ->  M = B*C = 8
    B, N, C = 2, 6, 4
    fv_size = (8, 16)
    bv_size = (8, 16)
    fv_dim = fv_size[0] * fv_size[1]
    bv_dim = bv_size[0] * bv_size[1]

    key = jax.random.PRNGKey(0)
    kx, k1, k2, k3, k4 = jax.random.split(key, 5)

    x = jax.random.normal(kx, (B, N, C, fv_size[0], fv_size[1]), dtype=jnp.float32)

    # Deterministic synthetic per-view Linear parameters, stored as (in, out)
    # so y = x @ W + b matches nn.Linear semantics.
    w1 = jax.random.normal(k1, (N, fv_dim, bv_dim), dtype=jnp.float32) * 0.05
    b1 = jax.random.normal(k2, (N, bv_dim), dtype=jnp.float32) * 0.05
    w2 = jax.random.normal(k3, (N, bv_dim, bv_dim), dtype=jnp.float32) * 0.05
    b2 = jax.random.normal(k4, (N, bv_dim), dtype=jnp.float32) * 0.05

    # "Stored" weights in bf16 (one-time cast, amortized like real model params).
    w1 = w1.astype(jnp.bfloat16)
    w2 = w2.astype(jnp.bfloat16)

    out = transform_module(x, w1, b1, w2, b2, bv_size)
    out = jax.block_until_ready(out)

    ref = reference(x, w1, b1, w2, b2, bv_size)
    assert out.shape == (B, C, bv_size[0], bv_size[1])
    assert jnp.allclose(out, ref, atol=5e-3, rtol=5e-3), "mismatch vs reference"

    print("KERNEL_OK")
</pallas_src>

<mosaic_0001>
module attributes {stable_mosaic.version = 11 : i64} {
  func.func @transform_kernel(%arg0: memref<6x8x128xf32, #tpu.memory_space<vmem>>, %arg1: memref<6x128x128xbf16, #tpu.memory_space<vmem>>, %arg2: memref<6x128xf32, #tpu.memory_space<vmem>>, %arg3: memref<6x128x128xbf16, #tpu.memory_space<vmem>>, %arg4: memref<6x128xf32, #tpu.memory_space<vmem>>, %arg5: memref<8x128xf32, #tpu.memory_space<vmem>>) attributes {dimension_semantics = [], scalar_prefetch = 0 : i64, scratch_operands = 0 : i64, tpu.core_type = #tpu.core_type<tc>} {
    %cst = arith.constant 0.000000e+00 : f32
    %0 = vector.broadcast %cst : f32 to vector<8x128xf32>
    %c0 = arith.constant 0 : index
    %c0_0 = arith.constant 0 : index
    %c0_1 = arith.constant 0 : index
    %1 = vector.load %arg0[%c0, %c0_0, %c0_1] : memref<6x8x128xf32, #tpu.memory_space<vmem>>, vector<1x8x128xf32>
    %2 = vector.shape_cast %1 : vector<1x8x128xf32> to vector<8x128xf32>
    %3 = arith.truncf %2 : vector<8x128xf32> to vector<8x128xbf16>
    %c0_2 = arith.constant 0 : index
    %c0_3 = arith.constant 0 : index
    %c0_4 = arith.constant 0 : index
    %4 = vector.load %arg1[%c0_2, %c0_3, %c0_4] : memref<6x128x128xbf16, #tpu.memory_space<vmem>>, vector<1x128x128xbf16>
    %5 = vector.shape_cast %4 : vector<1x128x128xbf16> to vector<128x128xbf16>
    %c0_5 = arith.constant 0 : index
    %c0_6 = arith.constant 0 : index
    %c0_7 = arith.constant 0 : index
    %6 = vector.load %arg3[%c0_5, %c0_6, %c0_7] : memref<6x128x128xbf16, #tpu.memory_space<vmem>>, vector<1x128x128xbf16>
    %7 = vector.shape_cast %6 : vector<1x128x128xbf16> to vector<128x128xbf16>
    %c0_8 = arith.constant 0 : index
    %c0_9 = arith.constant 0 : index
    %8 = vector.load %arg2[%c0_8, %c0_9] : memref<6x128xf32, #tpu.memory_space<vmem>>, vector<1x128xf32>
    %c0_10 = arith.constant 0 : index
    %c0_11 = arith.constant 0 : index
    %9 = vector.load %arg4[%c0_10, %c0_11] : memref<6x128xf32, #tpu.memory_space<vmem>>, vector<1x128xf32>
    %cst_12 = arith.constant dense<0.000000e+00> : vector<8x128xf32>
    %10 = tpu.matmul %3, %5, %cst_12 {dimension_numbers = #tpu.dot_dimension_numbers<[1], [0], [0], [1], [0, 0, 1, 1], [], []>} : vector<8x128xbf16>, vector<128x128xbf16>, vector<8x128xf32> -> vector<8x128xf32>
    %11 = vector.broadcast %8 : vector<1x128xf32> to vector<8x128xf32>
    %12 = arith.addf %10, %11 : vector<8x128xf32>
    %cst_13 = arith.constant 0.000000e+00 : f32
    %13 = vector.broadcast %cst_13 : f32 to vector<8x128xf32>
    %14 = arith.maximumf %12, %13 : vector<8x128xf32>
    %15 = arith.truncf %14 : vector<8x128xf32> to vector<8x128xbf16>
    %cst_14 = arith.constant dense<0.000000e+00> : vector<8x128xf32>
    %16 = tpu.matmul %15, %7, %cst_14 {dimension_numbers = #tpu.dot_dimension_numbers<[1], [0], [0], [1], [0, 0, 1, 1], [], []>} : vector<8x128xbf16>, vector<128x128xbf16>, vector<8x128xf32> -> vector<8x128xf32>
    %17 = vector.broadcast %9 : vector<1x128xf32> to vector<8x128xf32>
    %18 = arith.addf %16, %17 : vector<8x128xf32>
    %cst_15 = arith.constant 0.000000e+00 : f32
    %19 = vector.broadcast %cst_15 : f32 to vector<8x128xf32>
    %20 = arith.maximumf %18, %19 : vector<8x128xf32>
    %21 = arith.addf %0, %20 : vector<8x128xf32>
    %c1 = arith.constant 1 : index
    %c0_16 = arith.constant 0 : index
    %c0_17 = arith.constant 0 : index
    %22 = vector.load %arg0[%c1, %c0_16, %c0_17] : memref<6x8x128xf32, #tpu.memory_space<vmem>>, vector<1x8x128xf32>
    %23 = vector.shape_cast %22 : vector<1x8x128xf32> to vector<8x128xf32>
    %24 = arith.truncf %23 : vector<8x128xf32> to vector<8x128xbf16>
    %c1_18 = arith.constant 1 : index
    %c0_19 = arith.constant 0 : index
    %c0_20 = arith.constant 0 : index
    %25 = vector.load %arg1[%c1_18, %c0_19, %c0_20] : memref<6x128x128xbf16, #tpu.memory_space<vmem>>, vector<1x128x128xbf16>
    %26 = vector.shape_cast %25 : vector<1x128x128xbf16> to vector<128x128xbf16>
    %c1_21 = arith.constant 1 : index
    %c0_22 = arith.constant 0 : index
    %c0_23 = arith.constant 0 : index
    %27 = vector.load %arg3[%c1_21, %c0_22, %c0_23] : memref<6x128x128xbf16, #tpu.memory_space<vmem>>, vector<1x128x128xbf16>
    %28 = vector.shape_cast %27 : vector<1x128x128xbf16> to vector<128x128xbf16>
    %c1_24 = arith.constant 1 : index
    %c0_25 = arith.constant 0 : index
    %29 = vector.load %arg2[%c1_24, %c0_25] : memref<6x128xf32, #tpu.memory_space<vmem>>, vector<1x128xf32>
    %c1_26 = arith.constant 1 : index
    %c0_27 = arith.constant 0 : index
    %30 = vector.load %arg4[%c1_26, %c0_27] : memref<6x128xf32, #tpu.memory_space<vmem>>, vector<1x128xf32>
    %cst_28 = arith.constant dense<0.000000e+00> : vector<8x128xf32>
    %31 = tpu.matmul %24, %26, %cst_28 {dimension_numbers = #tpu.dot_dimension_numbers<[1], [0], [0], [1], [0, 0, 1, 1], [], []>} : vector<8x128xbf16>, vector<128x128xbf16>, vector<8x128xf32> -> vector<8x128xf32>
    %32 = vector.broadcast %29 : vector<1x128xf32> to vector<8x128xf32>
    %33 = arith.addf %31, %32 : vector<8x128xf32>
    %cst_29 = arith.constant 0.000000e+00 : f32
    %34 = vector.broadcast %cst_29 : f32 to vector<8x128xf32>
    %35 = arith.maximumf %33, %34 : vector<8x128xf32>
    %36 = arith.truncf %35 : vector<8x128xf32> to vector<8x128xbf16>
    %cst_30 = arith.constant dense<0.000000e+00> : vector<8x128xf32>
    %37 = tpu.matmul %36, %28, %cst_30 {dimension_numbers = #tpu.dot_dimension_numbers<[1], [0], [0], [1], [0, 0, 1, 1], [], []>} : vector<8x128xbf16>, vector<128x128xbf16>, vector<8x128xf32> -> vector<8x128xf32>
    %38 = vector.broadcast %30 : vector<1x128xf32> to vector<8x128xf32>
    %39 = arith.addf %37, %38 : vector<8x128xf32>
    %cst_31 = arith.constant 0.000000e+00 : f32
    %40 = vector.broadcast %cst_31 : f32 to vector<8x128xf32>
    %41 = arith.maximumf %39, %40 : vector<8x128xf32>
    %42 = arith.addf %21, %41 : vector<8x128xf32>
    %c2 = arith.constant 2 : index
    %c0_32 = arith.constant 0 : index
    %c0_33 = arith.constant 0 : index
    %43 = vector.load %arg0[%c2, %c0_32, %c0_33] : memref<6x8x128xf32, #tpu.memory_space<vmem>>, vector<1x8x128xf32>
    %44 = vector.shape_cast %43 : vector<1x8x128xf32> to vector<8x128xf32>
    %45 = arith.truncf %44 : vector<8x128xf32> to vector<8x128xbf16>
    %c2_34 = arith.constant 2 : index
    %c0_35 = arith.constant 0 : index
    %c0_36 = arith.constant 0 : index
    %46 = vector.load %arg1[%c2_34, %c0_35, %c0_36] : memref<6x128x128xbf16, #tpu.memory_space<vmem>>, vector<1x128x128xbf16>
    %47 = vector.shape_cast %46 : vector<1x128x128xbf16> to vector<128x128xbf16>
    %c2_37 = arith.constant 2 : index
    %c0_38 = arith.constant 0 : index
    %c0_39 = arith.constant 0 : index
    %48 = vector.load %arg3[%c2_37, %c0_38, %c0_39] : memref<6x128x128xbf16, #tpu.memory_space<vmem>>, vector<1x128x128xbf16>
    %49 = vector.shape_cast %48 : vector<1x128x128xbf16> to vector<128x128xbf16>
    %c2_40 = arith.constant 2 : index
    %c0_41 = arith.constant 0 : index
    %50 = vector.load %arg2[%c2_40, %c0_41] : memref<6x128xf32, #tpu.memory_space<vmem>>, vector<1x128xf32>
    %c2_42 = arith.constant 2 : index
    %c0_43 = arith.constant 0 : index
    %51 = vector.load %arg4[%c2_42, %c0_43] : memref<6x128xf32, #tpu.memory_space<vmem>>, vector<1x128xf32>
    %cst_44 = arith.constant dense<0.000000e+00> : vector<8x128xf32>
    %52 = tpu.matmul %45, %47, %cst_44 {dimension_numbers = #tpu.dot_dimension_numbers<[1], [0], [0], [1], [0, 0, 1, 1], [], []>} : vector<8x128xbf16>, vector<128x128xbf16>, vector<8x128xf32> -> vector<8x128xf32>
    %53 = vector.broadcast %50 : vector<1x128xf32> to vector<8x128xf32>
    %54 = arith.addf %52, %53 : vector<8x128xf32>
    %cst_45 = arith.constant 0.000000e+00 : f32
    %55 = vector.broadcast %cst_45 : f32 to vector<8x128xf32>
    %56 = arith.maximumf %54, %55 : vector<8x128xf32>
    %57 = arith.truncf %56 : vector<8x128xf32> to vector<8x128xbf16>
    %cst_46 = arith.constant dense<0.000000e+00> : vector<8x128xf32>
    %58 = tpu.matmul %57, %49, %cst_46 {dimension_numbers = #tpu.dot_dimension_numbers<[1], [0], [0], [1], [0, 0, 1, 1], [], []>} : vector<8x128xbf16>, vector<128x128xbf16>, vector<8x128xf32> -> vector<8x128xf32>
    %59 = vector.broadcast %51 : vector<1x128xf32> to vector<8x128xf32>
    %60 = arith.addf %58, %59 : vector<8x128xf32>
    %cst_47 = arith.constant 0.000000e+00 : f32
    %61 = vector.broadcast %cst_47 : f32 to vector<8x128xf32>
    %62 = arith.maximumf %60, %61 : vector<8x128xf32>
    %63 = arith.addf %42, %62 : vector<8x128xf32>
    %c3 = arith.constant 3 : index
    %c0_48 = arith.constant 0 : index
    %c0_49 = arith.constant 0 : index
    %64 = vector.load %arg0[%c3, %c0_48, %c0_49] : memref<6x8x128xf32, #tpu.memory_space<vmem>>, vector<1x8x128xf32>
    %65 = vector.shape_cast %64 : vector<1x8x128xf32> to vector<8x128xf32>
    %66 = arith.truncf %65 : vector<8x128xf32> to vector<8x128xbf16>
    %c3_50 = arith.constant 3 : index
    %c0_51 = arith.constant 0 : index
    %c0_52 = arith.constant 0 : index
    %67 = vector.load %arg1[%c3_50, %c0_51, %c0_52] : memref<6x128x128xbf16, #tpu.memory_space<vmem>>, vector<1x128x128xbf16>
    %68 = vector.shape_cast %67 : vector<1x128x128xbf16> to vector<128x128xbf16>
    %c3_53 = arith.constant 3 : index
    %c0_54 = arith.constant 0 : index
    %c0_55 = arith.constant 0 : index
    %69 = vector.load %arg3[%c3_53, %c0_54, %c0_55] : memref<6x128x128xbf16, #tpu.memory_space<vmem>>, vector<1x128x128xbf16>
    %70 = vector.shape_cast %69 : vector<1x128x128xbf16> to vector<128x128xbf16>
    %c3_56 = arith.constant 3 : index
    %c0_57 = arith.constant 0 : index
    %71 = vector.load %arg2[%c3_56, %c0_57] : memref<6x128xf32, #tpu.memory_space<vmem>>, vector<1x128xf32>
    %c3_58 = arith.constant 3 : index
    %c0_59 = arith.constant 0 : index
    %72 = vector.load %arg4[%c3_58, %c0_59] : memref<6x128xf32, #tpu.memory_space<vmem>>, vector<1x128xf32>
    %cst_60 = arith.constant dense<0.000000e+00> : vector<8x128xf32>
    %73 = tpu.matmul %66, %68, %cst_60 {dimension_numbers = #tpu.dot_dimension_numbers<[1], [0], [0], [1], [0, 0, 1, 1], [], []>} : vector<8x128xbf16>, vector<128x128xbf16>, vector<8x128xf32> -> vector<8x128xf32>
    %74 = vector.broadcast %71 : vector<1x128xf32> to vector<8x128xf32>
    %75 = arith.addf %73, %74 : vector<8x128xf32>
    %cst_61 = arith.constant 0.000000e+00 : f32
    %76 = vector.broadcast %cst_61 : f32 to vector<8x128xf32>
    %77 = arith.maximumf %75, %76 : vector<8x128xf32>
    %78 = arith.truncf %77 : vector<8x128xf32> to vector<8x128xbf16>
    %cst_62 = arith.constant dense<0.000000e+00> : vector<8x128xf32>
    %79 = tpu.matmul %78, %70, %cst_62 {dimension_numbers = #tpu.dot_dimension_numbers<[1], [0], [0], [1], [0, 0, 1, 1], [], []>} : vector<8x128xbf16>, vector<128x128xbf16>, vector<8x128xf32> -> vector<8x128xf32>
    %80 = vector.broadcast %72 : vector<1x128xf32> to vector<8x128xf32>
    %81 = arith.addf %79, %80 : vector<8x128xf32>
    %cst_63 = arith.constant 0.000000e+00 : f32
    %82 = vector.broadcast %cst_63 : f32 to vector<8x128xf32>
    %83 = arith.maximumf %81, %82 : vector<8x128xf32>
    %84 = arith.addf %63, %83 : vector<8x128xf32>
    %c4 = arith.constant 4 : index
    %c0_64 = arith.constant 0 : index
    %c0_65 = arith.constant 0 : index
    %85 = vector.load %arg0[%c4, %c0_64, %c0_65] : memref<6x8x128xf32, #tpu.memory_space<vmem>>, vector<1x8x128xf32>
    %86 = vector.shape_cast %85 : vector<1x8x128xf32> to vector<8x128xf32>
    %87 = arith.truncf %86 : vector<8x128xf32> to vector<8x128xbf16>
    %c4_66 = arith.constant 4 : index
    %c0_67 = arith.constant 0 : index
    %c0_68 = arith.constant 0 : index
    %88 = vector.load %arg1[%c4_66, %c0_67, %c0_68] : memref<6x128x128xbf16, #tpu.memory_space<vmem>>, vector<1x128x128xbf16>
    %89 = vector.shape_cast %88 : vector<1x128x128xbf16> to vector<128x128xbf16>
    %c4_69 = arith.constant 4 : index
    %c0_70 = arith.constant 0 : index
    %c0_71 = arith.constant 0 : index
    %90 = vector.load %arg3[%c4_69, %c0_70, %c0_71] : memref<6x128x128xbf16, #tpu.memory_space<vmem>>, vector<1x128x128xbf16>
    %91 = vector.shape_cast %90 : vector<1x128x128xbf16> to vector<128x128xbf16>
    %c4_72 = arith.constant 4 : index
    %c0_73 = arith.constant 0 : index
    %92 = vector.load %arg2[%c4_72, %c0_73] : memref<6x128xf32, #tpu.memory_space<vmem>>, vector<1x128xf32>
    %c4_74 = arith.constant 4 : index
    %c0_75 = arith.constant 0 : index
    %93 = vector.load %arg4[%c4_74, %c0_75] : memref<6x128xf32, #tpu.memory_space<vmem>>, vector<1x128xf32>
    %cst_76 = arith.constant dense<0.000000e+00> : vector<8x128xf32>
    %94 = tpu.matmul %87, %89, %cst_76 {dimension_numbers = #tpu.dot_dimension_numbers<[1], [0], [0], [1], [0, 0, 1, 1], [], []>} : vector<8x128xbf16>, vector<128x128xbf16>, vector<8x128xf32> -> vector<8x128xf32>
    %95 = vector.broadcast %92 : vector<1x128xf32> to vector<8x128xf32>
    %96 = arith.addf %94, %95 : vector<8x128xf32>
    %cst_77 = arith.constant 0.000000e+00 : f32
    %97 = vector.broadcast %cst_77 : f32 to vector<8x128xf32>
    %98 = arith.maximumf %96, %97 : vector<8x128xf32>
    %99 = arith.truncf %98 : vector<8x128xf32> to vector<8x128xbf16>
    %cst_78 = arith.constant dense<0.000000e+00> : vector<8x128xf32>
    %100 = tpu.matmul %99, %91, %cst_78 {dimension_numbers = #tpu.dot_dimension_numbers<[1], [0], [0], [1], [0, 0, 1, 1], [], []>} : vector<8x128xbf16>, vector<128x128xbf16>, vector<8x128xf32> -> vector<8x128xf32>
    %101 = vector.broadcast %93 : vector<1x128xf32> to vector<8x128xf32>
    %102 = arith.addf %100, %101 : vector<8x128xf32>
    %cst_79 = arith.constant 0.000000e+00 : f32
    %103 = vector.broadcast %cst_79 : f32 to vector<8x128xf32>
    %104 = arith.maximumf %102, %103 : vector<8x128xf32>
    %105 = arith.addf %84, %104 : vector<8x128xf32>
    %c5 = arith.constant 5 : index
    %c0_80 = arith.constant 0 : index
    %c0_81 = arith.constant 0 : index
    %106 = vector.load %arg0[%c5, %c0_80, %c0_81] : memref<6x8x128xf32, #tpu.memory_space<vmem>>, vector<1x8x128xf32>
    %107 = vector.shape_cast %106 : vector<1x8x128xf32> to vector<8x128xf32>
    %108 = arith.truncf %107 : vector<8x128xf32> to vector<8x128xbf16>
    %c5_82 = arith.constant 5 : index
    %c0_83 = arith.constant 0 : index
    %c0_84 = arith.constant 0 : index
    %109 = vector.load %arg1[%c5_82, %c0_83, %c0_84] : memref<6x128x128xbf16, #tpu.memory_space<vmem>>, vector<1x128x128xbf16>
    %110 = vector.shape_cast %109 : vector<1x128x128xbf16> to vector<128x128xbf16>
    %c5_85 = arith.constant 5 : index
    %c0_86 = arith.constant 0 : index
    %c0_87 = arith.constant 0 : index
    %111 = vector.load %arg3[%c5_85, %c0_86, %c0_87] : memref<6x128x128xbf16, #tpu.memory_space<vmem>>, vector<1x128x128xbf16>
    %112 = vector.shape_cast %111 : vector<1x128x128xbf16> to vector<128x128xbf16>
    %c5_88 = arith.constant 5 : index
    %c0_89 = arith.constant 0 : index
    %113 = vector.load %arg2[%c5_88, %c0_89] : memref<6x128xf32, #tpu.memory_space<vmem>>, vector<1x128xf32>
    %c5_90 = arith.constant 5 : index
    %c0_91 = arith.constant 0 : index
    %114 = vector.load %arg4[%c5_90, %c0_91] : memref<6x128xf32, #tpu.memory_space<vmem>>, vector<1x128xf32>
    %cst_92 = arith.constant dense<0.000000e+00> : vector<8x128xf32>
    %115 = tpu.matmul %108, %110, %cst_92 {dimension_numbers = #tpu.dot_dimension_numbers<[1], [0], [0], [1], [0, 0, 1, 1], [], []>} : vector<8x128xbf16>, vector<128x128xbf16>, vector<8x128xf32> -> vector<8x128xf32>
    %116 = vector.broadcast %113 : vector<1x128xf32> to vector<8x128xf32>
    %117 = arith.addf %115, %116 : vector<8x128xf32>
    %cst_93 = arith.constant 0.000000e+00 : f32
    %118 = vector.broadcast %cst_93 : f32 to vector<8x128xf32>
    %119 = arith.maximumf %117, %118 : vector<8x128xf32>
    %120 = arith.truncf %119 : vector<8x128xf32> to vector<8x128xbf16>
    %cst_94 = arith.constant dense<0.000000e+00> : vector<8x128xf32>
    %121 = tpu.matmul %120, %112, %cst_94 {dimension_numbers = #tpu.dot_dimension_numbers<[1], [0], [0], [1], [0, 0, 1, 1], [], []>} : vector<8x128xbf16>, vector<128x128xbf16>, vector<8x128xf32> -> vector<8x128xf32>
    %122 = vector.broadcast %114 : vector<1x128xf32> to vector<8x128xf32>
    %123 = arith.addf %121, %122 : vector<8x128xf32>
    %cst_95 = arith.constant 0.000000e+00 : f32
    %124 = vector.broadcast %cst_95 : f32 to vector<8x128xf32>
    %125 = arith.maximumf %123, %124 : vector<8x128xf32>
    %126 = arith.addf %105, %125 : vector<8x128xf32>
    %c0_96 = arith.constant 0 : index
    %c0_97 = arith.constant 0 : index
    %127 = vector.load %arg5[%c0_96, %c0_97] : memref<8x128xf32, #tpu.memory_space<vmem>>, vector<8x128xf32>
    tpu.vector_store %arg5[%c0_96, %c0_97], %126 {strides = array<i32>} : memref<8x128xf32, #tpu.memory_space<vmem>>, vector<8x128xf32>,
    return
  }
}

</mosaic_0001>

<llo_original>
// kernel: tpu_custom_call.1
$region0: #{tpu_custom_call.1}
  #allocation0 [shape = 'u32[]', space=smem, size = 0x4, offset = 0x4, fixed_abs, tag = 'smem constant byte address 0x4 - core index']
  #allocation1 [shape = 'u32[144,128]{1,0:T(1,128)}', space=vmem, size = 0x12000, scoped, tag = 'internal scratch']
  %s0 = inlined_call_operand.hbm [shape: f32[6,8,128], index: 0, kind: input, shape index: {}]
  %s1 = inlined_call_operand.hbm [shape: bf16[6,128,128], index: 1, kind: input, shape index: {}]
  %s2 = inlined_call_operand.hbm [shape: f32[6,128], index: 2, kind: input, shape index: {}]
  %s3 = inlined_call_operand.hbm [shape: bf16[6,128,128], index: 3, kind: input, shape index: {}]
  %s4 = inlined_call_operand.vmem [shape: f32[6,128], index: 4, kind: input, shape index: {}]
  %s5 = inlined_call_operand.hbm [shape: f32[8,128], index: 5, kind: output, shape index: {}]
  %s6 = sld [smem:[#allocation0]]
  $region46: #{tpu_custom_call.1} parent=0
    _
  %s8 = ssub.s32 1, %s6
  %s9 = scalar_select 0, %s8, %s6
  $region1: #{tpu_custom_call.1} parent=0
    #allocation2 [shape = 'u8[24576]{0}', space=vmem, size = 0x6000, scoped, tag = 'input window, operand 0, single buffered']
    #allocation3 [shape = 's32[1]{0}', space=sflag, size = 0x4, scoped, tag = 'scoped memory for tpu_custom_call.1']
    #allocation4 [shape = 's32[1]{0}', space=sflag, size = 0x4, scoped, tag = 'scoped memory for tpu_custom_call.1']
    #allocation5 [shape = 'u8[196608]{0}', space=vmem, size = 0x30000, scoped, tag = 'input window, operand 1, single buffered']
    #allocation6 [shape = 's32[1]{0}', space=sflag, size = 0x4, scoped, tag = 'scoped memory for tpu_custom_call.1']
    #allocation7 [shape = 'u8[4096]{0}', space=vmem, size = 0x1000, scoped, tag = 'input window, operand 2, single buffered']
    #allocation8 [shape = 'u8[196608]{0}', space=vmem, size = 0x30000, scoped, tag = 'input window, operand 3, single buffered']
    #allocation9 [shape = 's32[1]{0}', space=sflag, size = 0x4, scoped, tag = 'scoped memory for tpu_custom_call.1']
    #allocation10 [shape = 'u8[4096]{0}', space=vmem, size = 0x1000, scoped, tag = 'output window, operand 0, single buffered']
    %10 = vsyncpa [#allocation3], 0
    %11 = vsyncpa [#allocation6], 0
    %12 = vsyncpa [#allocation9], 0
    %13 = vsyncpa [#allocation4], 0
    // Predicated region
    $region2: #{tpu_custom_call.1} parent=1 // pred_check
      _
    $region3: #{tpu_custom_call.1} parent=1 // pred_check_branch
      %15 = sbr.rel (0) target = $region5
    $region4: #{tpu_custom_call.1} parent=1 // pred_region
      %s17 = ssub.s32 768, 768
      %18 = vsyncadd [#allocation3], %s17
      %s19 = sshll.u32 [#allocation2], 4
      %s20 = int_to_ptr.vmem [resolvable:$true] %s19
      %25 = dma.hbm_to_vmem [thread:$0]  %s0, 768, %s20, [#allocation3], 128, 128, 8
    $region5: #{tpu_custom_call.1} parent=1 // pred_fallthru
      _
    // Predicated region
    $region6: #{tpu_custom_call.1} parent=1 // pred_check
      _
    $region7: #{tpu_custom_call.1} parent=1 // pred_check_branch
      %27 = sbr.rel (0) target = $region9
    $region8: #{tpu_custom_call.1} parent=1 // pred_region
      %s29 = ssub.s32 6144, 6144
      %30 = vsyncadd [#allocation6], %s29
      %s31 = sshll.u32 [#allocation5], 4
      %s32 = int_to_ptr.vmem [resolvable:$true] %s31
      %37 = dma.hbm_to_vmem [thread:$0]  %s1, 6144, %s32, [#allocation6], 64, 64, 4
    $region9: #{tpu_custom_call.1} parent=1 // pred_fallthru
      _
    // Predicated region
    $region10: #{tpu_custom_call.1} parent=1 // pred_check
      _
    $region11: #{tpu_custom_call.1} parent=1 // pred_check_branch
      %39 = sbr.rel (0) target = $region13
    $region12: #{tpu_custom_call.1} parent=1 // pred_region
      %s41 = ssub.s32 128, 128
      %42 = vsyncadd [#allocation6], %s41
      %s44 = sshll.u32 [#allocation7], 4
      %s45 = int_to_ptr.vmem [resolvable:$true] %s44
      %47 = dma.hbm_to_vmem [thread:$0]  %s2, 128, %s45, [#allocation6]
    $region13: #{tpu_custom_call.1} parent=1 // pred_fallthru
      _
    // Predicated region
    $region14: #{tpu_custom_call.1} parent=1 // pred_check
      _
    $region15: #{tpu_custom_call.1} parent=1 // pred_check_branch
      %49 = sbr.rel (0) target = $region17
    $region16: #{tpu_custom_call.1} parent=1 // pred_region
      %s51 = ssub.s32 6144, 6144
      %52 = vsyncadd [#allocation9], %s51
      %s53 = sshll.u32 [#allocation8], 4
      %s54 = int_to_ptr.vmem [resolvable:$true] %s53
      %59 = dma.hbm_to_vmem [thread:$0]  %s3, 6144, %s54, [#allocation9], 64, 64, 4
    $region17: #{tpu_custom_call.1} parent=1 // pred_fallthru
      _
    // Predicated region
    $region18: #{tpu_custom_call.1} parent=1 // pred_check
      _
    $region19: #{tpu_custom_call.1} parent=1 // pred_check_branch
      %61 = sbr.rel (0) target = $region21
    $region20: #{tpu_custom_call.1} parent=1 // pred_region
      _
    $region21: #{tpu_custom_call.1} parent=1 // pred_fallthru
      _
    // Predicated region
    $region22: #{tpu_custom_call.1} parent=1 // pred_check
      _
    $region23: #{tpu_custom_call.1} parent=1 // pred_check_branch
      %63 = sbr.rel (0) target = $region25
    $region24: #{tpu_custom_call.1} parent=1 // pred_region
      %64 = dma.done [#allocation3], 768
    $region25: #{tpu_custom_call.1} parent=1 // pred_fallthru
      _
    // Predicated region
    $region26: #{tpu_custom_call.1} parent=1 // pred_check
      _
    $region27: #{tpu_custom_call.1} parent=1 // pred_check_branch
      %66 = sbr.rel (0) target = $region29
    $region28: #{tpu_custom_call.1} parent=1 // pred_region
      %67 = dma.done [#allocation6], 6144
    $region29: #{tpu_custom_call.1} parent=1 // pred_fallthru
      _
    // Predicated region
    $region30: #{tpu_custom_call.1} parent=1 // pred_check
      _
    $region31: #{tpu_custom_call.1} parent=1 // pred_check_branch
      %69 = sbr.rel (0) target = $region33
    $region32: #{tpu_custom_call.1} parent=1 // pred_region
      %70 = dma.done [#allocation6], 128
    $region33: #{tpu_custom_call.1} parent=1 // pred_fallthru
      _
    // Predicated region
    $region34: #{tpu_custom_call.1} parent=1 // pred_check
      _
    $region35: #{tpu_custom_call.1} parent=1 // pred_check_branch
      %72 = sbr.rel (0) target = $region37
    $region36: #{tpu_custom_call.1} parent=1 // pred_region
      %73 = dma.done [#allocation9], 6144
    $region37: #{tpu_custom_call.1} parent=1 // pred_fallthru
      _
    %v75 = vld [vmem:[#allocation2] sm:$0xff]
    %v76 = vpack.c.bf16 %v75, %v75
    %v77 = vld [vmem:[#allocation5] sm:$0xf]
    %v78 = vld [vmem:[#allocation5 + $0x4] sm:$0xf]
    %v79 = vld [vmem:[#allocation5 + $0x8] sm:$0xf]
    %v80 = vld [vmem:[#allocation5 + $0xc] sm:$0xf]
    %v81 = vld [vmem:[#allocation5 + $0x10] sm:$0xf]
    %v82 = vld [vmem:[#allocation5 + $0x14] sm:$0xf]
    %v83 = vld [vmem:[#allocation5 + $0x18] sm:$0xf]
    %v84 = vld [vmem:[#allocation5 + $0x1c] sm:$0xf]
    %v85 = vld [vmem:[#allocation5 + $0x20] sm:$0xf]
    %v86 = vld [vmem:[#allocation5 + $0x24] sm:$0xf]
    %v87 = vld [vmem:[#allocation5 + $0x28] sm:$0xf]
    %v88 = vld [vmem:[#allocation5 + $0x2c] sm:$0xf]
    %v89 = vld [vmem:[#allocation5 + $0x30] sm:$0xf]
    %v90 = vld [vmem:[#allocation5 + $0x34] sm:$0xf]
    %v91 = vld [vmem:[#allocation5 + $0x38] sm:$0xf]
    %v92 = vld [vmem:[#allocation5 + $0x3c] sm:$0xf]
    %v93 = vld [vmem:[#allocation8] sm:$0xf]
    %v94 = vld [vmem:[#allocation8 + $0x4] sm:$0xf]
    %v95 = vld [vmem:[#allocation8 + $0x8] sm:$0xf]
    %v96 = vld [vmem:[#allocation8 + $0xc] sm:$0xf]
    %v97 = vld [vmem:[#allocation8 + $0x10] sm:$0xf]
    %v98 = vld [vmem:[#allocation8 + $0x14] sm:$0xf]
    %v99 = vld [vmem:[#allocation8 + $0x18] sm:$0xf]
    %v100 = vld [vmem:[#allocation8 + $0x1c] sm:$0xf]
    %v101 = vld [vmem:[#allocation8 + $0x20] sm:$0xf]
    %v102 = vld [vmem:[#allocation8 + $0x24] sm:$0xf]
    %v103 = vld [vmem:[#allocation8 + $0x28] sm:$0xf]
    %v104 = vld [vmem:[#allocation8 + $0x2c] sm:$0xf]
    %v105 = vld [vmem:[#allocation8 + $0x30] sm:$0xf]
    %v106 = vld [vmem:[#allocation8 + $0x34] sm:$0xf]
    %v107 = vld [vmem:[#allocation8 + $0x38] sm:$0xf]
    %v108 = vld [vmem:[#allocation8 + $0x3c] sm:$0xf]
    %v109 = vld [vmem:[#allocation7] sm:$0x1]
    %v110 = vld [vmem:[%s4] sm:$0x1]
    %v111 = vlaneseq
    %v112 = vshrl.u32 %v111, 7
    %v113 = vsub.s32 0, %v112
    %v114 = vrot.slane %v109, %v113
    %v131 = vunpack.c.l.b16 %v77
    %v132 = vunpack.c.l.b16 %v78
    %v133 = vunpack.c.l.b16 %v79
    %v134 = vunpack.c.l.b16 %v80
    %v135 = vunpack.c.l.b16 %v81
    %v136 = vunpack.c.l.b16 %v82
    %v137 = vunpack.c.l.b16 %v83
    %v138 = vunpack.c.l.b16 %v84
    %v139 = vunpack.c.l.b16 %v85
    %v140 = vunpack.c.l.b16 %v86
    %v141 = vunpack.c.l.b16 %v87
    %v142 = vunpack.c.l.b16 %v88
    %v143 = vunpack.c.l.b16 %v89
    %v144 = vunpack.c.l.b16 %v90
    %v145 = vunpack.c.l.b16 %v91
    %v146 = vunpack.c.l.b16 %v92
    %v147 = vpack.c.b16 %v132, %v131
    %v148 = vpack.c.b16 %v134, %v133
    %v149 = vpack.c.b16 %v136, %v135
    %v150 = vpack.c.b16 %v138, %v137
    %v151 = vpack.c.b16 %v140, %v139
    %v152 = vpack.c.b16 %v142, %v141
    %v153 = vpack.c.b16 %v144, %v143
    %v154 = vpack.c.b16 %v146, %v145
    %163 = vmatprep.subr.bf16.mxu0 0
    %164 = vmatpush1.bf16.msra.mxu0 %v147
    %165 = vmatprep.subr.bf16.mxu0 0
    %166 = vmatpush1.bf16.msra.mxu0 %v148
    %167 = vmatprep.subr.bf16.mxu0 0
    %168 = vmatpush1.bf16.msra.mxu0 %v149
    %169 = vmatprep.subr.bf16.mxu0 0
    %170 = vmatpush1.bf16.msra.mxu0 %v150
    %171 = vmatprep.subr.bf16.mxu0 0
    %172 = vmatpush1.bf16.msra.mxu0 %v151
    %173 = vmatprep.subr.bf16.mxu0 0
    %174 = vmatpush1.bf16.msra.mxu0 %v152
    %175 = vmatprep.subr.bf16.mxu0 0
    %176 = vmatpush1.bf16.msra.mxu0 %v153
    %177 = vmatprep.subr.bf16.mxu0 0
    %178 = vmatpush1.bf16.msra.mxu0 %v154
    %179 = vmatprep.subr.bf16.mxu0 0
    %180 = vmatpush1.bf16.msra.mxu0 0
    %181 = vmatprep.subr.bf16.mxu0 0
    %182 = vmatpush1.bf16.msra.mxu0 0
    %183 = vmatprep.subr.bf16.mxu0 0
    %184 = vmatpush1.bf16.msra.mxu0 0
    %185 = vmatprep.subr.bf16.mxu0 0
    %186 = vmatpush1.bf16.msra.mxu0 0
    %187 = vmatprep.subr.bf16.mxu0 0
    %188 = vmatpush1.bf16.msra.mxu0 0
    %189 = vmatprep.subr.bf16.mxu0 0
    %190 = vmatpush1.bf16.msra.mxu0 0
    %191 = vmatprep.subr.bf16.mxu0 0
    %192 = vmatpush1.bf16.msra.mxu0 0
    %193 = vmatprep.subr.bf16.mxu0 0
    %194 = vmatpush1.bf16.msra.mxu0 0
    %195 = vmatprep.mubr.bf16.mxu0 0
    %196 = vmatmul.mubr.bf16.gmra.mrb[0].mxu0 %v76
    %v197 = vpop.f32.mrb[0].mxu0
    %v198 = vadd.f32 %v114, %v197
    %v199 = vpop.f32.mrb[0].mxu0
    %v200 = vpop.f32.mrb[0].mxu0
    %v201 = vpop.f32.mrb[0].mxu0
    %202 = vdwg.mxu0
    %v203 = vmax.f32 %v198, 0.0
    %v204 = vpack.c.bf16 %v203, %v203
    %v205 = vlaneseq
    %v206 = vshrl.u32 %v205, 7
    %v207 = vsub.s32 0, %v206
    %v208 = vrot.slane %v110, %v207
    %v225 = vunpack.c.l.b16 %v93
    %v226 = vunpack.c.l.b16 %v94
    %v227 = vunpack.c.l.b16 %v95
    %v228 = vunpack.c.l.b16 %v96
    %v229 = vunpack.c.l.b16 %v97
    %v230 = vunpack.c.l.b16 %v98
    %v231 = vunpack.c.l.b16 %v99
    %v232 = vunpack.c.l.b16 %v100
    %v233 = vunpack.c.l.b16 %v101
    %v234 = vunpack.c.l.b16 %v102
    %v235 = vunpack.c.l.b16 %v103
    %v236 = vunpack.c.l.b16 %v104
    %v237 = vunpack.c.l.b16 %v105
    %v238 = vunpack.c.l.b16 %v106
    %v239 = vunpack.c.l.b16 %v107
    %v240 = vunpack.c.l.b16 %v108
    %v241 = vpack.c.b16 %v226, %v225
    %v242 = vpack.c.b16 %v228, %v227
    %v243 = vpack.c.b16 %v230, %v229
    %v244 = vpack.c.b16 %v232, %v231
    %v245 = vpack.c.b16 %v234, %v233
    %v246 = vpack.c.b16 %v236, %v235
    %v247 = vpack.c.b16 %v238, %v237
    %v248 = vpack.c.b16 %v240, %v239
    %257 = vmatprep.subr.bf16.mxu0 0
    %258 = vmatpush1.bf16.msra.mxu0 %v241
    %259 = vmatprep.subr.bf16.mxu0 0
    %260 = vmatpush1.bf16.msra.mxu0 %v242
    %261 = vmatprep.subr.bf16.mxu0 0
    %262 = vmatpush1.bf16.msra.mxu0 %v243
    %263 = vmatprep.subr.bf16.mxu0 0
    %264 = vmatpush1.bf16.msra.mxu0 %v244
    %265 = vmatprep.subr.bf16.mxu0 0
    %266 = vmatpush1.bf16.msra.mxu0 %v245
    %267 = vmatprep.subr.bf16.mxu0 0
    %268 = vmatpush1.bf16.msra.mxu0 %v246
    %269 = vmatprep.subr.bf16.mxu0 0
    %270 = vmatpush1.bf16.msra.mxu0 %v247
    %271 = vmatprep.subr.bf16.mxu0 0
    %272 = vmatpush1.bf16.msra.mxu0 %v248
    %273 = vmatprep.subr.bf16.mxu0 0
    %274 = vmatpush1.bf16.msra.mxu0 0
    %275 = vmatprep.subr.bf16.mxu0 0
    %276 = vmatpush1.bf16.msra.mxu0 0
    %277 = vmatprep.subr.bf16.mxu0 0
    %278 = vmatpush1.bf16.msra.mxu0 0
    %279 = vmatprep.subr.bf16.mxu0 0
    %280 = vmatpush1.bf16.msra.mxu0 0
    %281 = vmatprep.subr.bf16.mxu0 0
    %282 = vmatpush1.bf16.msra.mxu0 0
    %283 = vmatprep.subr.bf16.mxu0 0
    %284 = vmatpush1.bf16.msra.mxu0 0
    %285 = vmatprep.subr.bf16.mxu0 0
    %286 = vmatpush1.bf16.msra.mxu0 0
    %287 = vmatprep.subr.bf16.mxu0 0
    %288 = vmatpush1.bf16.msra.mxu0 0
    %289 = vmatprep.mubr.bf16.mxu0 0
    %290 = vmatmul.mubr.bf16.gmra.mrb[0].mxu0 %v204
    %v291 = vpop.f32.mrb[0].mxu0
    %v292 = vadd.f32 %v208, %v291
    %v293 = vpop.f32.mrb[0].mxu0
    %v294 = vpop.f32.mrb[0].mxu0
    %v295 = vpop.f32.mrb[0].mxu0
    %296 = vdwg.mxu0
    %v297 = vmax.f32 %v292, 0.0
    %v298 = vadd.f32 %v297, 0.0
    %s299 = scalar_lea.vmem [#allocation2], 8
    %v300 = vld [vmem:[%s299] sm:$0xff]
    %v301 = vpack.c.bf16 %v300, %v300
    %s302 = scalar_lea.vmem [#allocation5], 64
    %v303 = vld [vmem:[%s302] sm:$0xf]
    %v304 = vld [vmem:[%s302 + $0x4] sm:$0xf]
    %v305 = vld [vmem:[%s302 + $0x8] sm:$0xf]
    %v306 = vld [vmem:[%s302 + $0xc] sm:$0xf]
    %v307 = vld [vmem:[%s302 + $0x10] sm:$0xf]
    %v308 = vld [vmem:[%s302 + $0x14] sm:$0xf]
    %v309 = vld [vmem:[%s302 + $0x18] sm:$0xf]
    %v310 = vld [vmem:[%s302 + $0x1c] sm:$0xf]
    %v311 = vld [vmem:[%s302 + $0x20] sm:$0xf]
    %v312 = vld [vmem:[%s302 + $0x24] sm:$0xf]
    %v313 = vld [vmem:[%s302 + $0x28] sm:$0xf]
    %v314 = vld [vmem:[%s302 + $0x2c] sm:$0xf]
    %v315 = vld [vmem:[%s302 + $0x30] sm:$0xf]
    %v316 = vld [vmem:[%s302 + $0x34] sm:$0xf]
    %v317 = vld [vmem:[%s302 + $0x38] sm:$0xf]
    %v318 = vld [vmem:[%s302 + $0x3c] sm:$0xf]
    %s319 = scalar_lea.vmem [#allocation8], 64
    %v320 = vld [vmem:[%s319] sm:$0xf]
    %v321 = vld [vmem:[%s319 + $0x4] sm:$0xf]
    %v322 = vld [vmem:[%s319 + $0x8] sm:$0xf]
    %v323 = vld [vmem:[%s319 + $0xc] sm:$0xf]
    %v324 = vld [vmem:[%s319 + $0x10] sm:$0xf]
    %v325 = vld [vmem:[%s319 + $0x14] sm:$0xf]
    %v326 = vld [vmem:[%s319 + $0x18] sm:$0xf]
    %v327 = vld [vmem:[%s319 + $0x1c] sm:$0xf]
    %v328 = vld [vmem:[%s319 + $0x20] sm:$0xf]
    %v329 = vld [vmem:[%s319 + $0x24] sm:$0xf]
    %v330 = vld [vmem:[%s319 + $0x28] sm:$0xf]
    %v331 = vld [vmem:[%s319 + $0x2c] sm:$0xf]
    %v332 = vld [vmem:[%s319 + $0x30] sm:$0xf]
    %v333 = vld [vmem:[%s319 + $0x34] sm:$0xf]
    %v334 = vld [vmem:[%s319 + $0x38] sm:$0xf]
    %v335 = vld [vmem:[%s319 + $0x3c] sm:$0xf]
    %v336 = vld [vmem:[#allocation7 + $0x1] sm:$0x1]
    %v337 = vld [vmem:[%s4 + $0x1] sm:$0x1]
    %v338 = vlaneseq
    %v339 = vshrl.u32 %v338, 7
    %v340 = vsub.s32 0, %v339
    %v341 = vrot.slane %v336, %v340
    %v358 = vunpack.c.l.b16 %v303
    %v359 = vunpack.c.l.b16 %v304
    %v360 = vunpack.c.l.b16 %v305
    %v361 = vunpack.c.l.b16 %v306
    %v362 = vunpack.c.l.b16 %v307
    %v363 = vunpack.c.l.b16 %v308
    %v364 = vunpack.c.l.b16 %v309
    %v365 = vunpack.c.l.b16 %v310
    %v366 = vunpack.c.l.b16 %v311
    %v367 = vunpack.c.l.b16 %v312
    %v368 = vunpack.c.l.b16 %v313
    %v369 = vunpack.c.l.b16 %v314
    %v370 = vunpack.c.l.b16 %v315
    %v371 = vunpack.c.l.b16 %v316
    %v372 = vunpack.c.l.b16 %v317
    %v373 = vunpack.c.l.b16 %v318
    %v374 = vpack.c.b16 %v359, %v358
    %v375 = vpack.c.b16 %v361, %v360
    %v376 = vpack.c.b16 %v363, %v362
    %v377 = vpack.c.b16 %v365, %v364
    %v378 = vpack.c.b16 %v367, %v366
    %v379 = vpack.c.b16 %v369, %v368
    %v380 = vpack.c.b16 %v371, %v370
    %v381 = vpack.c.b16 %v373, %v372
    %390 = vmatprep.subr.bf16.mxu0 0
    %391 = vmatpush1.bf16.msra.mxu0 %v374
    %392 = vmatprep.subr.bf16.mxu0 0
    %393 = vmatpush1.bf16.msra.mxu0 %v375
    %394 = vmatprep.subr.bf16.mxu0 0
    %395 = vmatpush1.bf16.msra.mxu0 %v376
    %396 = vmatprep.subr.bf16.mxu0 0
    %397 = vmatpush1.bf16.msra.mxu0 %v377
    %398 = vmatprep.subr.bf16.mxu0 0
    %399 = vmatpush1.bf16.msra.mxu0 %v378
    %400 = vmatprep.subr.bf16.mxu0 0
    %401 = vmatpush1.bf16.msra.mxu0 %v379
    %402 = vmatprep.subr.bf16.mxu0 0
    %403 = vmatpush1.bf16.msra.mxu0 %v380
    %404 = vmatprep.subr.bf16.mxu0 0
    %405 = vmatpush1.bf16.msra.mxu0 %v381
    %406 = vmatprep.subr.bf16.mxu0 0
    %407 = vmatpush1.bf16.msra.mxu0 0
    %408 = vmatprep.subr.bf16.mxu0 0
    %409 = vmatpush1.bf16.msra.mxu0 0
    %410 = vmatprep.subr.bf16.mxu0 0
    %411 = vmatpush1.bf16.msra.mxu0 0
    %412 = vmatprep.subr.bf16.mxu0 0
    %413 = vmatpush1.bf16.msra.mxu0 0
    %414 = vmatprep.subr.bf16.mxu0 0
    %415 = vmatpush1.bf16.msra.mxu0 0
    %416 = vmatprep.subr.bf16.mxu0 0
    %417 = vmatpush1.bf16.msra.mxu0 0
    %418 = vmatprep.subr.bf16.mxu0 0
    %419 = vmatpush1.bf16.msra.mxu0 0
    %420 = vmatprep.subr.bf16.mxu0 0
    %421 = vmatpush1.bf16.msra.mxu0 0
    %422 = vmatprep.mubr.bf16.mxu0 0
    %423 = vmatmul.mubr.bf16.gmra.mrb[0].mxu0 %v301
    %v424 = vpop.f32.mrb[0].mxu0
    %v425 = vadd.f32 %v341, %v424
    %v426 = vpop.f32.mrb[0].mxu0
    %v427 = vpop.f32.mrb[0].mxu0
    %v428 = vpop.f32.mrb[0].mxu0
    %429 = vdwg.mxu0
    %v430 = vmax.f32 %v425, 0.0
    %v431 = vpack.c.bf16 %v430, %v430
    %v432 = vlaneseq
    %v433 = vshrl.u32 %v432, 7
    %v434 = vsub.s32 0, %v433
    %v435 = vrot.slane %v337, %v434
    %v452 = vunpack.c.l.b16 %v320
    %v453 = vunpack.c.l.b16 %v321
    %v454 = vunpack.c.l.b16 %v322
    %v455 = vunpack.c.l.b16 %v323
    %v456 = vunpack.c.l.b16 %v324
    %v457 = vunpack.c.l.b16 %v325
    %v458 = vunpack.c.l.b16 %v326
    %v459 = vunpack.c.l.b16 %v327
    %v460 = vunpack.c.l.b16 %v328
    %v461 = vunpack.c.l.b16 %v329
    %v462 = vunpack.c.l.b16 %v330
    %v463 = vunpack.c.l.b16 %v331
    %v464 = vunpack.c.l.b16 %v332
    %v465 = vunpack.c.l.b16 %v333
    %v466 = vunpack.c.l.b16 %v334
    %v467 = vunpack.c.l.b16 %v335
    %v468 = vpack.c.b16 %v453, %v452
    %v469 = vpack.c.b16 %v455, %v454
    %v470 = vpack.c.b16 %v457, %v456
    %v471 = vpack.c.b16 %v459, %v458
    %v472 = vpack.c.b16 %v461, %v460
    %v473 = vpack.c.b16 %v463, %v462
    %v474 = vpack.c.b16 %v465, %v464
    %v475 = vpack.c.b16 %v467, %v466
    %484 = vmatprep.subr.bf16.mxu0 0
    %485 = vmatpush1.bf16.msra.mxu0 %v468
    %486 = vmatprep.subr.bf16.mxu0 0
    %487 = vmatpush1.bf16.msra.mxu0 %v469
    %488 = vmatprep.subr.bf16.mxu0 0
    %489 = vmatpush1.bf16.msra.mxu0 %v470
    %490 = vmatprep.subr.bf16.mxu0 0
    %491 = vmatpush1.bf16.msra.mxu0 %v471
    %492 = vmatprep.subr.bf16.mxu0 0
    %493 = vmatpush1.bf16.msra.mxu0 %v472
    %494 = vmatprep.subr.bf16.mxu0 0
    %495 = vmatpush1.bf16.msra.mxu0 %v473
    %496 = vmatprep.subr.bf16.mxu0 0
    %497 = vmatpush1.bf16.msra.mxu0 %v474
    %498 = vmatprep.subr.bf16.mxu0 0
    %499 = vmatpush1.bf16.msra.mxu0 %v475
    %500 = vmatprep.subr.bf16.mxu0 0
    %501 = vmatpush1.bf16.msra.mxu0 0
    %502 = vmatprep.subr.bf16.mxu0 0
    %503 = vmatpush1.bf16.msra.mxu0 0
    %504 = vmatprep.subr.bf16.mxu0 0
    %505 = vmatpush1.bf16.msra.mxu0 0
    %506 = vmatprep.subr.bf16.mxu0 0
    %507 = vmatpush1.bf16.msra.mxu0 0
    %508 = vmatprep.subr.bf16.mxu0 0
    %509 = vmatpush1.bf16.msra.mxu0 0
    %510 = vmatprep.subr.bf16.mxu0 0
    %511 = vmatpush1.bf16.msra.mxu0 0
    %512 = vmatprep.subr.bf16.mxu0 0
    %513 = vmatpush1.bf16.msra.mxu0 0
    %514 = vmatprep.subr.bf16.mxu0 0
    %515 = vmatpush1.bf16.msra.mxu0 0
    %516 = vmatprep.mubr.bf16.mxu0 0
    %517 = vmatmul.mubr.bf16.gmra.mrb[0].mxu0 %v431
    %v518 = vpop.f32.mrb[0].mxu0
    %v519 = vadd.f32 %v435, %v518
    %v520 = vpop.f32.mrb[0].mxu0
    %v521 = vpop.f32.mrb[0].mxu0
    %v522 = vpop.f32.mrb[0].mxu0
    %523 = vdwg.mxu0
    %v524 = vmax.f32 %v519, 0.0
    %v525 = vadd.f32 %v298, %v524
    %s526 = scalar_lea.vmem [#allocation2], 16
    %v527 = vld [vmem:[%s526] sm:$0xff]
    %v528 = vpack.c.bf16 %v527, %v527
    %s529 = scalar_lea.vmem [#allocation5], 128
    %v530 = vld [vmem:[%s529] sm:$0xf]
    %v531 = vld [vmem:[%s529 + $0x4] sm:$0xf]
    %v532 = vld [vmem:[%s529 + $0x8] sm:$0xf]
    %v533 = vld [vmem:[%s529 + $0xc] sm:$0xf]
    %v534 = vld [vmem:[%s529 + $0x10] sm:$0xf]
    %v535 = vld [vmem:[%s529 + $0x14] sm:$0xf]
    %v536 = vld [vmem:[%s529 + $0x18] sm:$0xf]
    %v537 = vld [vmem:[%s529 + $0x1c] sm:$0xf]
    %v538 = vld [vmem:[%s529 + $0x20] sm:$0xf]
    %v539 = vld [vmem:[%s529 + $0x24] sm:$0xf]
    %v540 = vld [vmem:[%s529 + $0x28] sm:$0xf]
    %v541 = vld [vmem:[%s529 + $0x2c] sm:$0xf]
    %v542 = vld [vmem:[%s529 + $0x30] sm:$0xf]
    %v543 = vld [vmem:[%s529 + $0x34] sm:$0xf]
    %v544 = vld [vmem:[%s529 + $0x38] sm:$0xf]
    %v545 = vld [vmem:[%s529 + $0x3c] sm:$0xf]
    %s546 = scalar_lea.vmem [#allocation8], 128
    %v547 = vld [vmem:[%s546] sm:$0xf]
    %v548 = vld [vmem:[%s546 + $0x4] sm:$0xf]
    %v549 = vld [vmem:[%s546 + $0x8] sm:$0xf]
    %v550 = vld [vmem:[%s546 + $0xc] sm:$0xf]
    %v551 = vld [vmem:[%s546 + $0x10] sm:$0xf]
    %v552 = vld [vmem:[%s546 + $0x14] sm:$0xf]
    %v553 = vld [vmem:[%s546 + $0x18] sm:$0xf]
    %v554 = vld [vmem:[%s546 + $0x1c] sm:$0xf]
    %v555 = vld [vmem:[%s546 + $0x20] sm:$0xf]
    %v556 = vld [vmem:[%s546 + $0x24] sm:$0xf]
    %v557 = vld [vmem:[%s546 + $0x28] sm:$0xf]
    %v558 = vld [vmem:[%s546 + $0x2c] sm:$0xf]
    %v559 = vld [vmem:[%s546 + $0x30] sm:$0xf]
    %v560 = vld [vmem:[%s546 + $0x34] sm:$0xf]
    %v561 = vld [vmem:[%s546 + $0x38] sm:$0xf]
    %v562 = vld [vmem:[%s546 + $0x3c] sm:$0xf]
    %v563 = vld [vmem:[#allocation7 + $0x2] sm:$0x1]
    %v564 = vld [vmem:[%s4 + $0x2] sm:$0x1]
    %v565 = vlaneseq
    %v566 = vshrl.u32 %v565, 7
    %v567 = vsub.s32 0, %v566
    %v568 = vrot.slane %v563, %v567
    %v585 = vunpack.c.l.b16 %v530
    %v586 = vunpack.c.l.b16 %v531
    %v587 = vunpack.c.l.b16 %v532
    %v588 = vunpack.c.l.b16 %v533
    %v589 = vunpack.c.l.b16 %v534
    %v590 = vunpack.c.l.b16 %v535
    %v591 = vunpack.c.l.b16 %v536
    %v592 = vunpack.c.l.b16 %v537
    %v593 = vunpack.c.l.b16 %v538
    %v594 = vunpack.c.l.b16 %v539
    %v595 = vunpack.c.l.b16 %v540
    %v596 = vunpack.c.l.b16 %v541
    %v597 = vunpack.c.l.b16 %v542
    %v598 = vunpack.c.l.b16 %v543
    %v599 = vunpack.c.l.b16 %v544
    %v600 = vunpack.c.l.b16 %v545
    %v601 = vpack.c.b16 %v586, %v585
    %v602 = vpack.c.b16 %v588, %v587
    %v603 = vpack.c.b16 %v590, %v589
    %v604 = vpack.c.b16 %v592, %v591
    %v605 = vpack.c.b16 %v594, %v593
    %v606 = vpack.c.b16 %v596, %v595
    %v607 = vpack.c.b16 %v598, %v597
    %v608 = vpack.c.b16 %v600, %v599
    %617 = vmatprep.subr.bf16.mxu0 0
    %618 = vmatpush1.bf16.msra.mxu0 %v601
    %619 = vmatprep.subr.bf16.mxu0 0
    %620 = vmatpush1.bf16.msra.mxu0 %v602
    %621 = vmatprep.subr.bf16.mxu0 0
    %622 = vmatpush1.bf16.msra.mxu0 %v603
    %623 = vmatprep.subr.bf16.mxu0 0
    %624 = vmatpush1.bf16.msra.mxu0 %v604
    %625 = vmatprep.subr.bf16.mxu0 0
    %626 = vmatpush1.bf16.msra.mxu0 %v605
    %627 = vmatprep.subr.bf16.mxu0 0
    %628 = vmatpush1.bf16.msra.mxu0 %v606
    %629 = vmatprep.subr.bf16.mxu0 0
    %630 = vmatpush1.bf16.msra.mxu0 %v607
    %631 = vmatprep.subr.bf16.mxu0 0
    %632 = vmatpush1.bf16.msra.mxu0 %v608
    %633 = vmatprep.subr.bf16.mxu0 0
    %634 = vmatpush1.bf16.msra.mxu0 0
    %635 = vmatprep.subr.bf16.mxu0 0
    %636 = vmatpush1.bf16.msra.mxu0 0
    %637 = vmatprep.subr.bf16.mxu0 0
    %638 = vmatpush1.bf16.msra.mxu0 0
    %639 = vmatprep.subr.bf16.mxu0 0
    %640 = vmatpush1.bf16.msra.mxu0 0
    %641 = vmatprep.subr.bf16.mxu0 0
    %642 = vmatpush1.bf16.msra.mxu0 0
    %643 = vmatprep.subr.bf16.mxu0 0
    %644 = vmatpush1.bf16.msra.mxu0 0
    %645 = vmatprep.subr.bf16.mxu0 0
    %646 = vmatpush1.bf16.msra.mxu0 0
    %647 = vmatprep.subr.bf16.mxu0 0
    %648 = vmatpush1.bf16.msra.mxu0 0
    %649 = vmatprep.mubr.bf16.mxu0 0
    %650 = vmatmul.mubr.bf16.gmra.mrb[0].mxu0 %v528
    %v651 = vpop.f32.mrb[0].mxu0
    %v652 = vadd.f32 %v568, %v651
    %v653 = vpop.f32.mrb[0].mxu0
    %v654 = vpop.f32.mrb[0].mxu0
    %v655 = vpop.f32.mrb[0].mxu0
    %656 = vdwg.mxu0
    %v657 = vmax.f32 %v652, 0.0
    %v658 = vpack.c.bf16 %v657, %v657
    %v659 = vlaneseq
    %v660 = vshrl.u32 %v659, 7
    %v661 = vsub.s32 0, %v660
    %v662 = vrot.slane %v564, %v661
    %v679 = vunpack.c.l.b16 %v547
    %v680 = vunpack.c.l.b16 %v548
    %v681 = vunpack.c.l.b16 %v549
    %v682 = vunpack.c.l.b16 %v550
    %v683 = vunpack.c.l.b16 %v551
    %v684 = vunpack.c.l.b16 %v552
    %v685 = vunpack.c.l.b16 %v553
    %v686 = vunpack.c.l.b16 %v554
    %v687 = vunpack.c.l.b16 %v555
    %v688 = vunpack.c.l.b16 %v556
    %v689 = vunpack.c.l.b16 %v557
    %v690 = vunpack.c.l.b16 %v558
    %v691 = vunpack.c.l.b16 %v559
    %v692 = vunpack.c.l.b16 %v560
    %v693 = vunpack.c.l.b16 %v561
    %v694 = vunpack.c.l.b16 %v562
    %v695 = vpack.c.b16 %v680, %v679
    %v696 = vpack.c.b16 %v682, %v681
    %v697 = vpack.c.b16 %v684, %v683
    %v698 = vpack.c.b16 %v686, %v685
    %v699 = vpack.c.b16 %v688, %v687
    %v700 = vpack.c.b16 %v690, %v689
    %v701 = vpack.c.b16 %v692, %v691
    %v702 = vpack.c.b16 %v694, %v693
    %711 = vmatprep.subr.bf16.mxu0 0
    %712 = vmatpush1.bf16.msra.mxu0 %v695
    %713 = vmatprep.subr.bf16.mxu0 0
    %714 = vmatpush1.bf16.msra.mxu0 %v696
    %715 = vmatprep.subr.bf16.mxu0 0
    %716 = vmatpush1.bf16.msra.mxu0 %v697
    %717 = vmatprep.subr.bf16.mxu0 0
    %718 = vmatpush1.bf16.msra.mxu0 %v698
    %719 = vmatprep.subr.bf16.mxu0 0
    %720 = vmatpush1.bf16.msra.mxu0 %v699
    %721 = vmatprep.subr.bf16.mxu0 0
    %722 = vmatpush1.bf16.msra.mxu0 %v700
    %723 = vmatprep.subr.bf16.mxu0 0
    %724 = vmatpush1.bf16.msra.mxu0 %v701
    %725 = vmatprep.subr.bf16.mxu0 0
    %726 = vmatpush1.bf16.msra.mxu0 %v702
    %727 = vmatprep.subr.bf16.mxu0 0
    %728 = vmatpush1.bf16.msra.mxu0 0
    %729 = vmatprep.subr.bf16.mxu0 0
    %730 = vmatpush1.bf16.msra.mxu0 0
    %731 = vmatprep.subr.bf16.mxu0 0
    %732 = vmatpush1.bf16.msra.mxu0 0
    %733 = vmatprep.subr.bf16.mxu0 0
    %734 = vmatpush1.bf16.msra.mxu0 0
    %735 = vmatprep.subr.bf16.mxu0 0
    %736 = vmatpush1.bf16.msra.mxu0 0
    %737 = vmatprep.subr.bf16.mxu0 0
    %738 = vmatpush1.bf16.msra.mxu0 0
    %739 = vmatprep.subr.bf16.mxu0 0
    %740 = vmatpush1.bf16.msra.mxu0 0
    %741 = vmatprep.subr.bf16.mxu0 0
    %742 = vmatpush1.bf16.msra.mxu0 0
    %743 = vmatprep.mubr.bf16.mxu0 0
    %744 = vmatmul.mubr.bf16.gmra.mrb[0].mxu0 %v658
    %v745 = vpop.f32.mrb[0].mxu0
    %v746 = vadd.f32 %v662, %v745
    %v747 = vpop.f32.mrb[0].mxu0
    %v748 = vpop.f32.mrb[0].mxu0
    %v749 = vpop.f32.mrb[0].mxu0
    %750 = vdwg.mxu0
    %v751 = vmax.f32 %v746, 0.0
    %v752 = vadd.f32 %v525, %v751
    %s753 = scalar_lea.vmem [#allocation2], 24
    %v754 = vld [vmem:[%s753] sm:$0xff]
    %v755 = vpack.c.bf16 %v754, %v754
    %s756 = scalar_lea.vmem [#allocation5], 192
    %v757 = vld [vmem:[%s756] sm:$0xf]
    %v758 = vld [vmem:[%s756 + $0x4] sm:$0xf]
    %v759 = vld [vmem:[%s756 + $0x8] sm:$0xf]
    %v760 = vld [vmem:[%s756 + $0xc] sm:$0xf]
    %v761 = vld [vmem:[%s756 + $0x10] sm:$0xf]
    %v762 = vld [vmem:[%s756 + $0x14] sm:$0xf]
    %v763 = vld [vmem:[%s756 + $0x18] sm:$0xf]
    %v764 = vld [vmem:[%s756 + $0x1c] sm:$0xf]
    %v765 = vld [vmem:[%s756 + $0x20] sm:$0xf]
    %v766 = vld [vmem:[%s756 + $0x24] sm:$0xf]
    %v767 = vld [vmem:[%s756 + $0x28] sm:$0xf]
    %v768 = vld [vmem:[%s756 + $0x2c] sm:$0xf]
    %v769 = vld [vmem:[%s756 + $0x30] sm:$0xf]
    %v770 = vld [vmem:[%s756 + $0x34] sm:$0xf]
    %v771 = vld [vmem:[%s756 + $0x38] sm:$0xf]
    %v772 = vld [vmem:[%s756 + $0x3c] sm:$0xf]
    %s773 = scalar_lea.vmem [#allocation8], 192
    %v774 = vld [vmem:[%s773] sm:$0xf]
    %v775 = vld [vmem:[%s773 + $0x4] sm:$0xf]
    %v776 = vld [vmem:[%s773 + $0x8] sm:$0xf]
    %v777 = vld [vmem:[%s773 + $0xc] sm:$0xf]
    %v778 = vld [vmem:[%s773 + $0x10] sm:$0xf]
    %v779 = vld [vmem:[%s773 + $0x14] sm:$0xf]
    %v780 = vld [vmem:[%s773 + $0x18] sm:$0xf]
    %v781 = vld [vmem:[%s773 + $0x1c] sm:$0xf]
    %v782 = vld [vmem:[%s773 + $0x20] sm:$0xf]
    %v783 = vld [vmem:[%s773 + $0x24] sm:$0xf]
    %v784 = vld [vmem:[%s773 + $0x28] sm:$0xf]
    %v785 = vld [vmem:[%s773 + $0x2c] sm:$0xf]
    %v786 = vld [vmem:[%s773 + $0x30] sm:$0xf]
    %v787 = vld [vmem:[%s773 + $0x34] sm:$0xf]
    %v788 = vld [vmem:[%s773 + $0x38] sm:$0xf]
    %v789 = vld [vmem:[%s773 + $0x3c] sm:$0xf]
    %v790 = vld [vmem:[#allocation7 + $0x3] sm:$0x1]
    %v791 = vld [vmem:[%s4 + $0x3] sm:$0x1]
    %v792 = vlaneseq
    %v793 = vshrl.u32 %v792, 7
    %v794 = vsub.s32 0, %v793
    %v795 = vrot.slane %v790, %v794
    %v812 = vunpack.c.l.b16 %v757
    %v813 = vunpack.c.l.b16 %v758
    %v814 = vunpack.c.l.b16 %v759
    %v815 = vunpack.c.l.b16 %v760
    %v816 = vunpack.c.l.b16 %v761
    %v817 = vunpack.c.l.b16 %v762
    %v818 = vunpack.c.l.b16 %v763
    %v819 = vunpack.c.l.b16 %v764
    %v820 = vunpack.c.l.b16 %v765
    %v821 = vunpack.c.l.b16 %v766
    %v822 = vunpack.c.l.b16 %v767
    %v823 = vunpack.c.l.b16 %v768
    %v824 = vunpack.c.l.b16 %v769
    %v825 = vunpack.c.l.b16 %v770
    %v826 = vunpack.c.l.b16 %v771
    %v827 = vunpack.c.l.b16 %v772
    %v828 = vpack.c.b16 %v813, %v812
    %v829 = vpack.c.b16 %v815, %v814
    %v830 = vpack.c.b16 %v817, %v816
    %v831 = vpack.c.b16 %v819, %v818
    %v832 = vpack.c.b16 %v821, %v820
    %v833 = vpack.c.b16 %v823, %v822
    %v834 = vpack.c.b16 %v825, %v824
    %v835 = vpack.c.b16 %v827, %v826
    %844 = vmatprep.subr.bf16.mxu0 0
    %845 = vmatpush1.bf16.msra.mxu0 %v828
    %846 = vmatprep.subr.bf16.mxu0 0
    %847 = vmatpush1.bf16.msra.mxu0 %v829
    %848 = vmatprep.subr.bf16.mxu0 0
    %849 = vmatpush1.bf16.msra.mxu0 %v830
    %850 = vmatprep.subr.bf16.mxu0 0
    %851 = vmatpush1.bf16.msra.mxu0 %v831
    %852 = vmatprep.subr.bf16.mxu0 0
    %853 = vmatpush1.bf16.msra.mxu0 %v832
    %854 = vmatprep.subr.bf16.mxu0 0
    %855 = vmatpush1.bf16.msra.mxu0 %v833
    %856 = vmatprep.subr.bf16.mxu0 0
    %857 = vmatpush1.bf16.msra.mxu0 %v834
    %858 = vmatprep.subr.bf16.mxu0 0
    %859 = vmatpush1.bf16.msra.mxu0 %v835
    %860 = vmatprep.subr.bf16.mxu0 0
    %861 = vmatpush1.bf16.msra.mxu0 0
    %862 = vmatprep.subr.bf16.mxu0 0
    %863 = vmatpush1.bf16.msra.mxu0 0
    %864 = vmatprep.subr.bf16.mxu0 0
    %865 = vmatpush1.bf16.msra.mxu0 0
    %866 = vmatprep.subr.bf16.mxu0 0
    %867 = vmatpush1.bf16.msra.mxu0 0
    %868 = vmatprep.subr.bf16.mxu0 0
    %869 = vmatpush1.bf16.msra.mxu0 0
    %870 = vmatprep.subr.bf16.mxu0 0
    %871 = vmatpush1.bf16.msra.mxu0 0
    %872 = vmatprep.subr.bf16.mxu0 0
    %873 = vmatpush1.bf16.msra.mxu0 0
    %874 = vmatprep.subr.bf16.mxu0 0
    %875 = vmatpush1.bf16.msra.mxu0 0
    %876 = vmatprep.mubr.bf16.mxu0 0
    %877 = vmatmul.mubr.bf16.gmra.mrb[0].mxu0 %v755
    %v878 = vpop.f32.mrb[0].mxu0
    %v879 = vadd.f32 %v795, %v878
    %v880 = vpop.f32.mrb[0].mxu0
    %v881 = vpop.f32.mrb[0].mxu0
    %v882 = vpop.f32.mrb[0].mxu0
    %883 = vdwg.mxu0
    %v884 = vmax.f32 %v879, 0.0
    %v885 = vpack.c.bf16 %v884, %v884
    %v886 = vlaneseq
    %v887 = vshrl.u32 %v886, 7
    %v888 = vsub.s32 0, %v887
    %v889 = vrot.slane %v791, %v888
    %v906 = vunpack.c.l.b16 %v774
    %v907 = vunpack.c.l.b16 %v775
    %v908 = vunpack.c.l.b16 %v776
    %v909 = vunpack.c.l.b16 %v777
    %v910 = vunpack.c.l.b16 %v778
    %v911 = vunpack.c.l.b16 %v779
    %v912 = vunpack.c.l.b16 %v780
    %v913 = vunpack.c.l.b16 %v781
    %v914 = vunpack.c.l.b16 %v782
    %v915 = vunpack.c.l.b16 %v783
    %v916 = vunpack.c.l.b16 %v784
    %v917 = vunpack.c.l.b16 %v785
    %v918 = vunpack.c.l.b16 %v786
    %v919 = vunpack.c.l.b16 %v787
    %v920 = vunpack.c.l.b16 %v788
    %v921 = vunpack.c.l.b16 %v789
    %v922 = vpack.c.b16 %v907, %v906
    %v923 = vpack.c.b16 %v909, %v908
    %v924 = vpack.c.b16 %v911, %v910
    %v925 = vpack.c.b16 %v913, %v912
    %v926 = vpack.c.b16 %v915, %v914
    %v927 = vpack.c.b16 %v917, %v916
    %v928 = vpack.c.b16 %v919, %v918
    %v929 = vpack.c.b16 %v921, %v920
    %938 = vmatprep.subr.bf16.mxu0 0
    %939 = vmatpush1.bf16.msra.mxu0 %v922
    %940 = vmatprep.subr.bf16.mxu0 0
    %941 = vmatpush1.bf16.msra.mxu0 %v923
    %942 = vmatprep.subr.bf16.mxu0 0
    %943 = vmatpush1.bf16.msra.mxu0 %v924
    %944 = vmatprep.subr.bf16.mxu0 0
    %945 = vmatpush1.bf16.msra.mxu0 %v925
    %946 = vmatprep.subr.bf16.mxu0 0
    %947 = vmatpush1.bf16.msra.mxu0 %v926
    %948 = vmatprep.subr.bf16.mxu0 0
    %949 = vmatpush1.bf16.msra.mxu0 %v927
    %950 = vmatprep.subr.bf16.mxu0 0
    %951 = vmatpush1.bf16.msra.mxu0 %v928
    %952 = vmatprep.subr.bf16.mxu0 0
    %953 = vmatpush1.bf16.msra.mxu0 %v929
    %954 = vmatprep.subr.bf16.mxu0 0
    %955 = vmatpush1.bf16.msra.mxu0 0
    %956 = vmatprep.subr.bf16.mxu0 0
    %957 = vmatpush1.bf16.msra.mxu0 0
    %958 = vmatprep.subr.bf16.mxu0 0
    %959 = vmatpush1.bf16.msra.mxu0 0
    %960 = vmatprep.subr.bf16.mxu0 0
    %961 = vmatpush1.bf16.msra.mxu0 0
    %962 = vmatprep.subr.bf16.mxu0 0
    %963 = vmatpush1.bf16.msra.mxu0 0
    %964 = vmatprep.subr.bf16.mxu0 0
    %965 = vmatpush1.bf16.msra.mxu0 0
    %966 = vmatprep.subr.bf16.mxu0 0
    %967 = vmatpush1.bf16.msra.mxu0 0
    %968 = vmatprep.subr.bf16.mxu0 0
    %969 = vmatpush1.bf16.msra.mxu0 0
    %970 = vmatprep.mubr.bf16.mxu0 0
    %971 = vmatmul.mubr.bf16.gmra.mrb[0].mxu0 %v885
    %v972 = vpop.f32.mrb[0].mxu0
    %v973 = vadd.f32 %v889, %v972
    %v974 = vpop.f32.mrb[0].mxu0
    %v975 = vpop.f32.mrb[0].mxu0
    %v976 = vpop.f32.mrb[0].mxu0
    %977 = vdwg.mxu0
    %v978 = vmax.f32 %v973, 0.0
    %v979 = vadd.f32 %v752, %v978
    %s980 = scalar_lea.vmem [#allocation2], 32
    %v981 = vld [vmem:[%s980] sm:$0xff]
    %v982 = vpack.c.bf16 %v981, %v981
    %s983 = scalar_lea.vmem [#allocation5], 256
    %v984 = vld [vmem:[%s983] sm:$0xf]
    %v985 = vld [vmem:[%s983 + $0x4] sm:$0xf]
    %v986 = vld [vmem:[%s983 + $0x8] sm:$0xf]
    %v987 = vld [vmem:[%s983 + $0xc] sm:$0xf]
    %v988 = vld [vmem:[%s983 + $0x10] sm:$0xf]
    %v989 = vld [vmem:[%s983 + $0x14] sm:$0xf]
    %v990 = vld [vmem:[%s983 + $0x18] sm:$0xf]
    %v991 = vld [vmem:[%s983 + $0x1c] sm:$0xf]
    %v992 = vld [vmem:[%s983 + $0x20] sm:$0xf]
    %v993 = vld [vmem:[%s983 + $0x24] sm:$0xf]
    %v994 = vld [vmem:[%s983 + $0x28] sm:$0xf]
    %v995 = vld [vmem:[%s983 + $0x2c] sm:$0xf]
    %v996 = vld [vmem:[%s983 + $0x30] sm:$0xf]
    %v997 = vld [vmem:[%s983 + $0x34] sm:$0xf]
    %v998 = vld [vmem:[%s983 + $0x38] sm:$0xf]
    %v999 = vld [vmem:[%s983 + $0x3c] sm:$0xf]
    %s1000 = scalar_lea.vmem [#allocation8], 256
    %v1001 = vld [vmem:[%s1000] sm:$0xf]
    %v1002 = vld [vmem:[%s1000 + $0x4] sm:$0xf]
    %v1003 = vld [vmem:[%s1000 + $0x8] sm:$0xf]
    %v1004 = vld [vmem:[%s1000 + $0xc] sm:$0xf]
    %v1005 = vld [vmem:[%s1000 + $0x10] sm:$0xf]
    %v1006 = vld [vmem:[%s1000 + $0x14] sm:$0xf]
    %v1007 = vld [vmem:[%s1000 + $0x18] sm:$0xf]
    %v1008 = vld [vmem:[%s1000 + $0x1c] sm:$0xf]
    %v1009 = vld [vmem:[%s1000 + $0x20] sm:$0xf]
    %v1010 = vld [vmem:[%s1000 + $0x24] sm:$0xf]
    %v1011 = vld [vmem:[%s1000 + $0x28] sm:$0xf]
    %v1012 = vld [vmem:[%s1000 + $0x2c] sm:$0xf]
    %v1013 = vld [vmem:[%s1000 + $0x30] sm:$0xf]
    %v1014 = vld [vmem:[%s1000 + $0x34] sm:$0xf]
    %v1015 = vld [vmem:[%s1000 + $0x38] sm:$0xf]
    %v1016 = vld [vmem:[%s1000 + $0x3c] sm:$0xf]
    %v1017 = vld [vmem:[#allocation7 + $0x4] sm:$0x1]
    %v1018 = vld [vmem:[%s4 + $0x4] sm:$0x1]
    %v1019 = vlaneseq
    %v1020 = vshrl.u32 %v1019, 7
    %v1021 = vsub.s32 0, %v1020
    %v1022 = vrot.slane %v1017, %v1021
    %v1039 = vunpack.c.l.b16 %v984
    %v1040 = vunpack.c.l.b16 %v985
    %v1041 = vunpack.c.l.b16 %v986
    %v1042 = vunpack.c.l.b16 %v987
    %v1043 = vunpack.c.l.b16 %v988
    %v1044 = vunpack.c.l.b16 %v989
    %v1045 = vunpack.c.l.b16 %v990
    %v1046 = vunpack.c.l.b16 %v991
    %v1047 = vunpack.c.l.b16 %v992
    %v1048 = vunpack.c.l.b16 %v993
    %v1049 = vunpack.c.l.b16 %v994
    %v1050 = vunpack.c.l.b16 %v995
    %v1051 = vunpack.c.l.b16 %v996
    %v1052 = vunpack.c.l.b16 %v997
    %v1053 = vunpack.c.l.b16 %v998
    %v1054 = vunpack.c.l.b16 %v999
    %v1055 = vpack.c.b16 %v1040, %v1039
    %v1056 = vpack.c.b16 %v1042, %v1041
    %v1057 = vpack.c.b16 %v1044, %v1043
    %v1058 = vpack.c.b16 %v1046, %v1045
    %v1059 = vpack.c.b16 %v1048, %v1047
    %v1060 = vpack.c.b16 %v1050, %v1049
    %v1061 = vpack.c.b16 %v1052, %v1051
    %v1062 = vpack.c.b16 %v1054, %v1053
    %1071 = vmatprep.subr.bf16.mxu0 0
    %1072 = vmatpush1.bf16.msra.mxu0 %v1055
    %1073 = vmatprep.subr.bf16.mxu0 0
    %1074 = vmatpush1.bf16.msra.mxu0 %v1056
    %1075 = vmatprep.subr.bf16.mxu0 0
    %1076 = vmatpush1.bf16.msra.mxu0 %v1057
    %1077 = vmatprep.subr.bf16.mxu0 0
    %1078 = vmatpush1.bf16.msra.mxu0 %v1058
    %1079 = vmatprep.subr.bf16.mxu0 0
    %1080 = vmatpush1.bf16.msra.mxu0 %v1059
    %1081 = vmatprep.subr.bf16.mxu0 0
    %1082 = vmatpush1.bf16.msra.mxu0 %v1060
    %1083 = vmatprep.subr.bf16.mxu0 0
    %1084 = vmatpush1.bf16.msra.mxu0 %v1061
    %1085 = vmatprep.subr.bf16.mxu0 0
    %1086 = vmatpush1.bf16.msra.mxu0 %v1062
    %1087 = vmatprep.subr.bf16.mxu0 0
    %1088 = vmatpush1.bf16.msra.mxu0 0
    %1089 = vmatprep.subr.bf16.mxu0 0
    %1090 = vmatpush1.bf16.msra.mxu0 0
    %1091 = vmatprep.subr.bf16.mxu0 0
    %1092 = vmatpush1.bf16.msra.mxu0 0
    %1093 = vmatprep.subr.bf16.mxu0 0
    %1094 = vmatpush1.bf16.msra.mxu0 0
    %1095 = vmatprep.subr.bf16.mxu0 0
    %1096 = vmatpush1.bf16.msra.mxu0 0
    %1097 = vmatprep.subr.bf16.mxu0 0
    %1098 = vmatpush1.bf16.msra.mxu0 0
    %1099 = vmatprep.subr.bf16.mxu0 0
    %1100 = vmatpush1.bf16.msra.mxu0 0
    %1101 = vmatprep.subr.bf16.mxu0 0
    %1102 = vmatpush1.bf16.msra.mxu0 0
    %1103 = vmatprep.mubr.bf16.mxu0 0
    %1104 = vmatmul.mubr.bf16.gmra.mrb[0].mxu0 %v982
    %v1105 = vpop.f32.mrb[0].mxu0
    %v1106 = vadd.f32 %v1022, %v1105
    %v1107 = vpop.f32.mrb[0].mxu0
    %v1108 = vpop.f32.mrb[0].mxu0
    %v1109 = vpop.f32.mrb[0].mxu0
    %1110 = vdwg.mxu0
    %v1111 = vmax.f32 %v1106, 0.0
    %v1112 = vpack.c.bf16 %v1111, %v1111
    %v1113 = vlaneseq
    %v1114 = vshrl.u32 %v1113, 7
    %v1115 = vsub.s32 0, %v1114
    %v1116 = vrot.slane %v1018, %v1115
    %v1133 = vunpack.c.l.b16 %v1001
    %v1134 = vunpack.c.l.b16 %v1002
    %v1135 = vunpack.c.l.b16 %v1003
    %v1136 = vunpack.c.l.b16 %v1004
    %v1137 = vunpack.c.l.b16 %v1005
    %v1138 = vunpack.c.l.b16 %v1006
    %v1139 = vunpack.c.l.b16 %v1007
    %v1140 = vunpack.c.l.b16 %v1008
    %v1141 = vunpack.c.l.b16 %v1009
    %v1142 = vunpack.c.l.b16 %v1010
    %v1143 = vunpack.c.l.b16 %v1011
    %v1144 = vunpack.c.l.b16 %v1012
    %v1145 = vunpack.c.l.b16 %v1013
    %v1146 = vunpack.c.l.b16 %v1014
    %v1147 = vunpack.c.l.b16 %v1015
    %v1148 = vunpack.c.l.b16 %v1016
    %v1149 = vpack.c.b16 %v1134, %v1133
    %v1150 = vpack.c.b16 %v1136, %v1135
    %v1151 = vpack.c.b16 %v1138, %v1137
    %v1152 = vpack.c.b16 %v1140, %v1139
    %v1153 = vpack.c.b16 %v1142, %v1141
    %v1154 = vpack.c.b16 %v1144, %v1143
    %v1155 = vpack.c.b16 %v1146, %v1145
    %v1156 = vpack.c.b16 %v1148, %v1147
    %1165 = vmatprep.subr.bf16.mxu0 0
    %1166 = vmatpush1.bf16.msra.mxu0 %v1149
    %1167 = vmatprep.subr.bf16.mxu0 0
    %1168 = vmatpush1.bf16.msra.mxu0 %v1150
    %1169 = vmatprep.subr.bf16.mxu0 0
    %1170 = vmatpush1.bf16.msra.mxu0 %v1151
    %1171 = vmatprep.subr.bf16.mxu0 0
    %1172 = vmatpush1.bf16.msra.mxu0 %v1152
    %1173 = vmatprep.subr.bf16.mxu0 0
    %1174 = vmatpush1.bf16.msra.mxu0 %v1153
    %1175 = vmatprep.subr.bf16.mxu0 0
    %1176 = vmatpush1.bf16.msra.mxu0 %v1154
    %1177 = vmatprep.subr.bf16.mxu0 0
    %1178 = vmatpush1.bf16.msra.mxu0 %v1155
    %1179 = vmatprep.subr.bf16.mxu0 0
    %1180 = vmatpush1.bf16.msra.mxu0 %v1156
    %1181 = vmatprep.subr.bf16.mxu0 0
    %1182 = vmatpush1.bf16.msra.mxu0 0
    %1183 = vmatprep.subr.bf16.mxu0 0
    %1184 = vmatpush1.bf16.msra.mxu0 0
    %1185 = vmatprep.subr.bf16.mxu0 0
    %1186 = vmatpush1.bf16.msra.mxu0 0
    %1187 = vmatprep.subr.bf16.mxu0 0
    %1188 = vmatpush1.bf16.msra.mxu0 0
    %1189 = vmatprep.subr.bf16.mxu0 0
    %1190 = vmatpush1.bf16.msra.mxu0 0
    %1191 = vmatprep.subr.bf16.mxu0 0
    %1192 = vmatpush1.bf16.msra.mxu0 0
    %1193 = vmatprep.subr.bf16.mxu0 0
    %1194 = vmatpush1.bf16.msra.mxu0 0
    %1195 = vmatprep.subr.bf16.mxu0 0
    %1196 = vmatpush1.bf16.msra.mxu0 0
    %1197 = vmatprep.mubr.bf16.mxu0 0
    %1198 = vmatmul.mubr.bf16.gmra.mrb[0].mxu0 %v1112
    %v1199 = vpop.f32.mrb[0].mxu0
    %v1200 = vadd.f32 %v1116, %v1199
    %v1201 = vpop.f32.mrb[0].mxu0
    %v1202 = vpop.f32.mrb[0].mxu0
    %v1203 = vpop.f32.mrb[0].mxu0
    %1204 = vdwg.mxu0
    %v1205 = vmax.f32 %v1200, 0.0
    %v1206 = vadd.f32 %v979, %v1205
    %s1207 = scalar_lea.vmem [#allocation2], 40
    %v1208 = vld [vmem:[%s1207] sm:$0xff]
    %v1209 = vpack.c.bf16 %v1208, %v1208
    %s1210 = scalar_lea.vmem [#allocation5], 320
    %v1211 = vld [vmem:[%s1210] sm:$0xf]
    %v1212 = vld [vmem:[%s1210 + $0x4] sm:$0xf]
    %v1213 = vld [vmem:[%s1210 + $0x8] sm:$0xf]
    %v1214 = vld [vmem:[%s1210 + $0xc] sm:$0xf]
    %v1215 = vld [vmem:[%s1210 + $0x10] sm:$0xf]
    %v1216 = vld [vmem:[%s1210 + $0x14] sm:$0xf]
    %v1217 = vld [vmem:[%s1210 + $0x18] sm:$0xf]
    %v1218 = vld [vmem:[%s1210 + $0x1c] sm:$0xf]
    %v1219 = vld [vmem:[%s1210 + $0x20] sm:$0xf]
    %v1220 = vld [vmem:[%s1210 + $0x24] sm:$0xf]
    %v1221 = vld [vmem:[%s1210 + $0x28] sm:$0xf]
    %v1222 = vld [vmem:[%s1210 + $0x2c] sm:$0xf]
    %v1223 = vld [vmem:[%s1210 + $0x30] sm:$0xf]
    %v1224 = vld [vmem:[%s1210 + $0x34] sm:$0xf]
    %v1225 = vld [vmem:[%s1210 + $0x38] sm:$0xf]
    %v1226 = vld [vmem:[%s1210 + $0x3c] sm:$0xf]
    %s1227 = scalar_lea.vmem [#allocation8], 320
    %v1228 = vld [vmem:[%s1227] sm:$0xf]
    %v1229 = vld [vmem:[%s1227 + $0x4] sm:$0xf]
    %v1230 = vld [vmem:[%s1227 + $0x8] sm:$0xf]
    %v1231 = vld [vmem:[%s1227 + $0xc] sm:$0xf]
    %v1232 = vld [vmem:[%s1227 + $0x10] sm:$0xf]
    %v1233 = vld [vmem:[%s1227 + $0x14] sm:$0xf]
    %v1234 = vld [vmem:[%s1227 + $0x18] sm:$0xf]
    %v1235 = vld [vmem:[%s1227 + $0x1c] sm:$0xf]
    %v1236 = vld [vmem:[%s1227 + $0x20] sm:$0xf]
    %v1237 = vld [vmem:[%s1227 + $0x24] sm:$0xf]
    %v1238 = vld [vmem:[%s1227 + $0x28] sm:$0xf]
    %v1239 = vld [vmem:[%s1227 + $0x2c] sm:$0xf]
    %v1240 = vld [vmem:[%s1227 + $0x30] sm:$0xf]
    %v1241 = vld [vmem:[%s1227 + $0x34] sm:$0xf]
    %v1242 = vld [vmem:[%s1227 + $0x38] sm:$0xf]
    %v1243 = vld [vmem:[%s1227 + $0x3c] sm:$0xf]
    %v1244 = vld [vmem:[#allocation7 + $0x5] sm:$0x1]
    %v1245 = vld [vmem:[%s4 + $0x5] sm:$0x1]
    %v1246 = vlaneseq
    %v1247 = vshrl.u32 %v1246, 7
    %v1248 = vsub.s32 0, %v1247
    %v1249 = vrot.slane %v1244, %v1248
    %v1266 = vunpack.c.l.b16 %v1211
    %v1267 = vunpack.c.l.b16 %v1212
    %v1268 = vunpack.c.l.b16 %v1213
    %v1269 = vunpack.c.l.b16 %v1214
    %v1270 = vunpack.c.l.b16 %v1215
    %v1271 = vunpack.c.l.b16 %v1216
    %v1272 = vunpack.c.l.b16 %v1217
    %v1273 = vunpack.c.l.b16 %v1218
    %v1274 = vunpack.c.l.b16 %v1219
    %v1275 = vunpack.c.l.b16 %v1220
    %v1276 = vunpack.c.l.b16 %v1221
    %v1277 = vunpack.c.l.b16 %v1222
    %v1278 = vunpack.c.l.b16 %v1223
    %v1279 = vunpack.c.l.b16 %v1224
    %v1280 = vunpack.c.l.b16 %v1225
    %v1281 = vunpack.c.l.b16 %v1226
    %v1282 = vpack.c.b16 %v1267, %v1266
    %v1283 = vpack.c.b16 %v1269, %v1268
    %v1284 = vpack.c.b16 %v1271, %v1270
    %v1285 = vpack.c.b16 %v1273, %v1272
    %v1286 = vpack.c.b16 %v1275, %v1274
    %v1287 = vpack.c.b16 %v1277, %v1276
    %v1288 = vpack.c.b16 %v1279, %v1278
    %v1289 = vpack.c.b16 %v1281, %v1280
    %1298 = vmatprep.subr.bf16.mxu0 0
    %1299 = vmatpush1.bf16.msra.mxu0 %v1282
    %1300 = vmatprep.subr.bf16.mxu0 0
    %1301 = vmatpush1.bf16.msra.mxu0 %v1283
    %1302 = vmatprep.subr.bf16.mxu0 0
    %1303 = vmatpush1.bf16.msra.mxu0 %v1284
    %1304 = vmatprep.subr.bf16.mxu0 0
    %1305 = vmatpush1.bf16.msra.mxu0 %v1285
    %1306 = vmatprep.subr.bf16.mxu0 0
    %1307 = vmatpush1.bf16.msra.mxu0 %v1286
    %1308 = vmatprep.subr.bf16.mxu0 0
    %1309 = vmatpush1.bf16.msra.mxu0 %v1287
    %1310 = vmatprep.subr.bf16.mxu0 0
    %1311 = vmatpush1.bf16.msra.mxu0 %v1288
    %1312 = vmatprep.subr.bf16.mxu0 0
    %1313 = vmatpush1.bf16.msra.mxu0 %v1289
    %1314 = vmatprep.subr.bf16.mxu0 0
    %1315 = vmatpush1.bf16.msra.mxu0 0
    %1316 = vmatprep.subr.bf16.mxu0 0
    %1317 = vmatpush1.bf16.msra.mxu0 0
    %1318 = vmatprep.subr.bf16.mxu0 0
    %1319 = vmatpush1.bf16.msra.mxu0 0
    %1320 = vmatprep.subr.bf16.mxu0 0
    %1321 = vmatpush1.bf16.msra.mxu0 0
    %1322 = vmatprep.subr.bf16.mxu0 0
    %1323 = vmatpush1.bf16.msra.mxu0 0
    %1324 = vmatprep.subr.bf16.mxu0 0
    %1325 = vmatpush1.bf16.msra.mxu0 0
    %1326 = vmatprep.subr.bf16.mxu0 0
    %1327 = vmatpush1.bf16.msra.mxu0 0
    %1328 = vmatprep.subr.bf16.mxu0 0
    %1329 = vmatpush1.bf16.msra.mxu0 0
    %1330 = vmatprep.mubr.bf16.mxu0 0
    %1331 = vmatmul.mubr.bf16.gmra.mrb[0].mxu0 %v1209
    %v1332 = vpop.f32.mrb[0].mxu0
    %v1333 = vadd.f32 %v1249, %v1332
    %v1334 = vpop.f32.mrb[0].mxu0
    %v1335 = vpop.f32.mrb[0].mxu0
    %v1336 = vpop.f32.mrb[0].mxu0
    %1337 = vdwg.mxu0
    %v1338 = vmax.f32 %v1333, 0.0
    %v1339 = vpack.c.bf16 %v1338, %v1338
    %v1340 = vlaneseq
    %v1341 = vshrl.u32 %v1340, 7
    %v1342 = vsub.s32 0, %v1341
    %v1343 = vrot.slane %v1245, %v1342
    %v1360 = vunpack.c.l.b16 %v1228
    %v1361 = vunpack.c.l.b16 %v1229
    %v1362 = vunpack.c.l.b16 %v1230
    %v1363 = vunpack.c.l.b16 %v1231
    %v1364 = vunpack.c.l.b16 %v1232
    %v1365 = vunpack.c.l.b16 %v1233
    %v1366 = vunpack.c.l.b16 %v1234
    %v1367 = vunpack.c.l.b16 %v1235
    %v1368 = vunpack.c.l.b16 %v1236
    %v1369 = vunpack.c.l.b16 %v1237
    %v1370 = vunpack.c.l.b16 %v1238
    %v1371 = vunpack.c.l.b16 %v1239
    %v1372 = vunpack.c.l.b16 %v1240
    %v1373 = vunpack.c.l.b16 %v1241
    %v1374 = vunpack.c.l.b16 %v1242
    %v1375 = vunpack.c.l.b16 %v1243
    %v1376 = vpack.c.b16 %v1361, %v1360
    %v1377 = vpack.c.b16 %v1363, %v1362
    %v1378 = vpack.c.b16 %v1365, %v1364
    %v1379 = vpack.c.b16 %v1367, %v1366
    %v1380 = vpack.c.b16 %v1369, %v1368
    %v1381 = vpack.c.b16 %v1371, %v1370
    %v1382 = vpack.c.b16 %v1373, %v1372
    %v1383 = vpack.c.b16 %v1375, %v1374
    %1392 = vmatprep.subr.bf16.mxu0 0
    %1393 = vmatpush1.bf16.msra.mxu0 %v1376
    %1394 = vmatprep.subr.bf16.mxu0 0
    %1395 = vmatpush1.bf16.msra.mxu0 %v1377
    %1396 = vmatprep.subr.bf16.mxu0 0
    %1397 = vmatpush1.bf16.msra.mxu0 %v1378
    %1398 = vmatprep.subr.bf16.mxu0 0
    %1399 = vmatpush1.bf16.msra.mxu0 %v1379
    %1400 = vmatprep.subr.bf16.mxu0 0
    %1401 = vmatpush1.bf16.msra.mxu0 %v1380
    %1402 = vmatprep.subr.bf16.mxu0 0
    %1403 = vmatpush1.bf16.msra.mxu0 %v1381
    %1404 = vmatprep.subr.bf16.mxu0 0
    %1405 = vmatpush1.bf16.msra.mxu0 %v1382
    %1406 = vmatprep.subr.bf16.mxu0 0
    %1407 = vmatpush1.bf16.msra.mxu0 %v1383
    %1408 = vmatprep.subr.bf16.mxu0 0
    %1409 = vmatpush1.bf16.msra.mxu0 0
    %1410 = vmatprep.subr.bf16.mxu0 0
    %1411 = vmatpush1.bf16.msra.mxu0 0
    %1412 = vmatprep.subr.bf16.mxu0 0
    %1413 = vmatpush1.bf16.msra.mxu0 0
    %1414 = vmatprep.subr.bf16.mxu0 0
    %1415 = vmatpush1.bf16.msra.mxu0 0
    %1416 = vmatprep.subr.bf16.mxu0 0
    %1417 = vmatpush1.bf16.msra.mxu0 0
    %1418 = vmatprep.subr.bf16.mxu0 0
    %1419 = vmatpush1.bf16.msra.mxu0 0
    %1420 = vmatprep.subr.bf16.mxu0 0
    %1421 = vmatpush1.bf16.msra.mxu0 0
    %1422 = vmatprep.subr.bf16.mxu0 0
    %1423 = vmatpush1.bf16.msra.mxu0 0
    %1424 = vmatprep.mubr.bf16.mxu0 0
    %1425 = vmatmul.mubr.bf16.gmra.mrb[0].mxu0 %v1339
    %v1426 = vpop.f32.mrb[0].mxu0
    %v1427 = vadd.f32 %v1343, %v1426
    %v1428 = vpop.f32.mrb[0].mxu0
    %v1429 = vpop.f32.mrb[0].mxu0
    %v1430 = vpop.f32.mrb[0].mxu0
    %1431 = vdwg.mxu0
    %v1432 = vmax.f32 %v1427, 0.0
    %v1433 = vadd.f32 %v1206, %v1432
    %1434 = vst [vmem:[#allocation10] sm:$0xff] %v1433
    // Predicated region
    $region38: #{tpu_custom_call.1} parent=1 // pred_check
      _
    $region39: #{tpu_custom_call.1} parent=1 // pred_check_branch
      %1436 = sbr.rel (0) target = $region41
    $region40: #{tpu_custom_call.1} parent=1 // pred_region
      %s1438 = ssub.s32 128, 128
      %1439 = vsyncadd [#allocation4], %s1438
      %s1441 = sshll.u32 [#allocation10], 4
      %s1442 = int_to_ptr.vmem [resolvable:$true] %s1441
      %1444 = dma.vmem_to_hbm [thread:$0]  %s1442, 128, %s5, [#allocation4]
    $region41: #{tpu_custom_call.1} parent=1 // pred_fallthru
      _
    // Predicated region
    $region42: #{tpu_custom_call.1} parent=1 // pred_check
      _
    $region43: #{tpu_custom_call.1} parent=1 // pred_check_branch
      %1446 = sbr.rel (0) target = $region45
    $region44: #{tpu_custom_call.1} parent=1 // pred_region
      %1447 = dma.done [#allocation4], 128
    $region45: #{tpu_custom_call.1} parent=1 // pred_fallthru
      _
    %1448 = vsyncpa [#allocation3], 1
    %1449 = vsyncpa [#allocation6], 1
    %1450 = vsyncpa [#allocation9], 1
    %1451 = vsyncpa [#allocation4], 1

</llo_original>
